<compile_context>
chip_gen: v6e
topology: v6e:2x2x1
jax: 0.10.0
libtpu: 0.0.40
codegen_flags: <defaults>
</compile_context>

<pallas_src>
import jax
import jax.numpy as jnp
from jax.experimental import pallas as pl
from jax.experimental.pallas import tpu as pltpu

EMB = 4            # embedding_size
CAT_HIDDEN = 64    # cat_hidden_size
HIDDEN = 64        # hidden_size
EPS = 1e-5         # torch default eps for LayerNorm and BatchNorm1d


def _round_up(x, m):
    return ((x + m - 1) // m) * m


def fused_mlp_kernel(idx_ref, num_ref, temb_ref, w1c_ref, w1n_ref,
                     w2_ref, w3_ref, w4t_ref, bias_ref, out_ref):
    f32 = jnp.float32
    bf16 = jnp.bfloat16

    bias = bias_ref[...]                        # (8, 128) f32 slab
    pb = bias[0:1, 0:CAT_HIDDEN]                # cat_proj Linear bias
    b1 = bias[1:2, :]                           # Linear1 bias (LN-affine/BN0/BN1 folded)
    b2 = bias[2:3, 0:HIDDEN]                    # Linear2 bias (BN2 folded)
    b3 = bias[3:4, 0:HIDDEN // 2]               # Linear3 bias (BN3 folded)
    b4 = bias[4:5, 0:1]                         # final Linear bias

    # ---- fused embedding lookup + cat_proj Linear as ONE one-hot matmul ----
    # Slot offsets (j * slot) are already folded into idx in the wrapper, and
    # the one-hot is built directly in bf16 (no f32 temp, no repack).
    idx = idx_ref[...]                          # (TB, n_cat) int32, offsets pre-added
    tb, n_cat = idx.shape
    k = temb_ref.shape[0]                       # n_cat * slot
    lane = jax.lax.broadcasted_iota(jnp.int32, (tb, k), 1)
    onehot = (lane == idx[:, 0:1]).astype(bf16)
    for j in range(1, n_cat):                   # static unroll (n_cat == 4)
        onehot = onehot + (lane == idx[:, j:j + 1]).astype(bf16)
    c = jnp.dot(onehot, temb_ref[...], preferred_element_type=f32) + pb   # (TB, 64)

    # LayerNorm(64), single-pass variance; its affine is pre-folded into w1c/b1.
    mu = jnp.mean(c, axis=-1, keepdims=True)
    ex2 = jnp.mean(c * c, axis=-1, keepdims=True)
    c = (c - mu) * jax.lax.rsqrt(ex2 - mu * mu + EPS)

    # ---- encoder (Dropout = identity in eval; BatchNorms folded) ----
    h = (jnp.dot(c.astype(bf16), w1c_ref[...], preferred_element_type=f32)
         + jnp.dot(num_ref[...].astype(bf16), w1n_ref[...], preferred_element_type=f32)
         + b1)
    h = h * jax.nn.sigmoid(h)                   # SiLU (f32)

    h = jnp.dot(h.astype(bf16), w2_ref[...], preferred_element_type=f32) + b2
    h = h * jax.nn.sigmoid(h)

    h = jnp.dot(h.astype(bf16), w3_ref[...], preferred_element_type=f32) + b3
    h = h * jax.nn.sigmoid(h)

    # ---- final Linear(32 -> 1), computed as W4^T @ h^T so the output block is
    #      lane-dense (1, TB) instead of a masked (TB, 1) store. ----
    res = jax.lax.dot_general(w4t_ref[...], h.astype(bf16),
                              (((1,), (1,)), ((), ())),
                              preferred_element_type=f32)   # (8, TB), row 0 valid
    out_ref[...] = res[0:1, :] + b4


def init_params(key, cat_sizes, num_size):
    """Deterministic init matching Model.init_weights (normal(0, 0.02), zero bias,
    LayerNorm weight=1/bias=0, BatchNorm running stats mean=0/var=1, affine=False).
    Note: init_weights overwrites the padding_idx row too (padding_idx only zeroes
    gradients), so embedding row 0 is left at its normal(0, 0.02) value."""
    std = 0.02
    n_cat = len(cat_sizes)
    keys = jax.random.split(key, 8)

    emb = []
    for i, s in enumerate(cat_sizes):
        w = jax.random.normal(jax.random.fold_in(keys[0], i), (s, EMB), jnp.float32) * std
        emb.append(w)

    in_enc = num_size + CAT_HIDDEN
    p = {
        "emb": emb,
        "pw": jax.random.normal(keys[1], (EMB * n_cat, CAT_HIDDEN), jnp.float32) * std,
        "pb": jnp.zeros((CAT_HIDDEN,), jnp.float32),
        "lnw": jnp.ones((CAT_HIDDEN,), jnp.float32),
        "lnb": jnp.zeros((CAT_HIDDEN,), jnp.float32),
        "bn0m": jnp.zeros((in_enc,), jnp.float32),
        "bn0v": jnp.ones((in_enc,), jnp.float32),
        "w1": jax.random.normal(keys[2], (in_enc, 2 * HIDDEN), jnp.float32) * std,
        "b1": jnp.zeros((2 * HIDDEN,), jnp.float32),
        "bn1m": jnp.zeros((2 * HIDDEN,), jnp.float32),
        "bn1v": jnp.ones((2 * HIDDEN,), jnp.float32),
        "w2": jax.random.normal(keys[3], (2 * HIDDEN, HIDDEN), jnp.float32) * std,
        "b2": jnp.zeros((HIDDEN,), jnp.float32),
        "bn2m": jnp.zeros((HIDDEN,), jnp.float32),
        "bn2v": jnp.ones((HIDDEN,), jnp.float32),
        "w3": jax.random.normal(keys[4], (HIDDEN, HIDDEN // 2), jnp.float32) * std,
        "b3": jnp.zeros((HIDDEN // 2,), jnp.float32),
        "bn3m": jnp.zeros((HIDDEN // 2,), jnp.float32),
        "bn3v": jnp.ones((HIDDEN // 2,), jnp.float32),
        "w4": jax.random.normal(keys[5], (HIDDEN // 2, 1), jnp.float32) * std,
        "b4": jnp.zeros((1,), jnp.float32),
    }
    return p


def model_forward(cat_features, num_features, params, *, block_batch=1024):
    f32 = jnp.float32
    bf16 = jnp.bfloat16

    n_cat = len(params["emb"])
    num_size = num_features.shape[1]
    B = cat_features.shape[0]

    # ---- trace-time constant folding ------------------------------------
    # (a) fuse embedding tables with the cat_proj weight: row v of table j maps
    #     directly to its 64-wide contribution -> in-kernel gather becomes a
    #     single one-hot matmul.
    slot = max(8, _round_up(max(e.shape[0] for e in params["emb"]), 8))
    tbl = []
    for j, e in enumerate(params["emb"]):
        tj = e.astype(f32) @ params["pw"][j * EMB:(j + 1) * EMB]      # (vocab_j, 64)
        tbl.append(jnp.pad(tj, ((0, slot - e.shape[0]), (0, 0))))
    t_all = jnp.concatenate(tbl, axis=0)                               # (n_cat*slot, 64)

    # (b) fold eval-mode BatchNorms (affine=False) into adjacent Linears and the
    #     LayerNorm affine into the cat half of Linear1.  Module ordering is
    #     LinearK -> BNK -> SiLU, so BN1/2/3 fold into LinearK's OUTPUT.
    s0 = jax.lax.rsqrt(params["bn0v"] + EPS)
    s0c, s0n = s0[:CAT_HIDDEN], s0[CAT_HIDDEN:]
    m0c, m0n = params["bn0m"][:CAT_HIDDEN], params["bn0m"][CAT_HIDDEN:]
    s1 = jax.lax.rsqrt(params["bn1v"] + EPS)
    s2 = jax.lax.rsqrt(params["bn2v"] + EPS)
    s3 = jax.lax.rsqrt(params["bn3v"] + EPS)

    w1c, w1n = params["w1"][:CAT_HIDDEN], params["w1"][CAT_HIDDEN:]
    w1c_f = w1c * (params["lnw"] * s0c)[:, None] * s1[None, :]
    w1n_f = w1n * s0n[:, None] * s1[None, :]
    b1_f = (params["b1"]
            + ((params["lnb"] - m0c) * s0c) @ w1c
            - (m0n * s0n) @ w1n
            - params["bn1m"]) * s1
    w2_f = params["w2"] * s2[None, :]
    b2_f = (params["b2"] - params["bn2m"]) * s2
    w3_f = params["w3"] * s3[None, :]
    b3_f = (params["b3"] - params["bn3m"]) * s3
    w4t = jnp.zeros((8, HIDDEN // 2), f32).at[0].set(params["w4"][:, 0])   # padded W4^T

    # (c) pack all small bias vectors into one (8, 128) f32 VMEM slab.
    slab = jnp.zeros((8, 128), f32)
    slab = slab.at[0, :CAT_HIDDEN].set(params["pb"])
    slab = slab.at[1, :2 * HIDDEN].set(b1_f)
    slab = slab.at[2, :HIDDEN].set(b2_f)
    slab = slab.at[3, :HIDDEN // 2].set(b3_f)
    slab = slab.at[4, 0].set(params["b4"][0])

    # ---- input prep: fold per-feature slot offsets into the indices ------
    offsets = (jnp.arange(n_cat, dtype=jnp.int32) * slot)[None, :]
    idx = cat_features.astype(jnp.int32) + offsets
    num = num_features.astype(f32)

    # ---- batch tiling -----------------------------------------------------
    # Large tiles amortize the ~0.35-0.6 us per-grid-step overhead; for small
    # batches shrink TB so there are still >= 2 blocks (v7x has 2 TensorCores),
    # then rebalance so the last block isn't mostly padding.
    TB = min(block_batch, max(8, _round_up(pl.cdiv(B, 2), 8)))
    nb = pl.cdiv(B, TB)
    TB = max(8, _round_up(pl.cdiv(B, nb), 8))
    nb = pl.cdiv(B, TB)
    pad = nb * TB - B
    if pad:
        # Only the ragged remainder rows are padded (no full-array copy).
        idx = jnp.pad(idx, ((0, pad), (0, 0)))
        num = jnp.pad(num, ((0, pad), (0, 0)))

    args = (idx, num,
            t_all.astype(bf16), w1c_f.astype(bf16), w1n_f.astype(bf16),
            w2_f.astype(bf16), w3_f.astype(bf16), w4t.astype(bf16), slab)

    def resident(a):  # weight/bias operands: same block every grid step (VMEM-resident)
        return pl.BlockSpec(a.shape, lambda i: (0, 0))

    out3 = pl.pallas_call(
        fused_mlp_kernel,
        out_shape=jax.ShapeDtypeStruct((nb, 1, TB), f32),
        grid=(nb,),
        in_specs=[
            pl.BlockSpec((TB, n_cat), lambda i: (i, 0)),       # cat indices (per block)
            pl.BlockSpec((TB, num_size), lambda i: (i, 0)),    # numeric features (per block)
            resident(args[2]), resident(args[3]), resident(args[4]),
            resident(args[5]), resident(args[6]), resident(args[7]), resident(args[8]),
        ],
        out_specs=pl.BlockSpec((None, 1, TB), lambda i: (i, 0, 0)),  # lane-dense (1, TB)
        compiler_params=pltpu.CompilerParams(dimension_semantics=("parallel",)),
    )(*args)

    # Padded tail rows (if any) are discarded here.
    return out3.reshape(nb * TB, 1)[:B]


if __name__ == "__main__":
    key = jax.random.PRNGKey(0)
    k_params, k_cat, k_num = jax.random.split(key, 3)

    B = 256
    cat_features_size = [11, 7, 13, 9]   # vocab sizes for 4 categorical features
    num_features_size = 16

    params = init_params(k_params, cat_features_size, num_features_size)

    cat_features = jnp.stack(
        [jax.random.randint(jax.random.fold_in(k_cat, i), (B,), 0, s, dtype=jnp.int32)
         for i, s in enumerate(cat_features_size)], axis=1)           # (B, 4) int32
    num_features = jax.random.normal(k_num, (B, num_features_size), jnp.float32)

    pred = jax.jit(model_forward)(cat_features, num_features, params)
    pred = jax.block_until_ready(pred)
    assert pred.shape == (B, 1) and pred.dtype == jnp.float32
    assert bool(jnp.all(jnp.isfinite(pred)))
    print("KERNEL_OK")
</pallas_src>

<mosaic_0001>
module attributes {stable_mosaic.version = 11 : i64} {
  func.func @fused_mlp_kernel(%arg0: i32, %arg1: memref<128x4xi32, #tpu.memory_space<vmem>>, %arg2: memref<128x16xf32, #tpu.memory_space<vmem>>, %arg3: memref<64x64xbf16, #tpu.memory_space<vmem>>, %arg4: memref<64x128xbf16, #tpu.memory_space<vmem>>, %arg5: memref<16x128xbf16, #tpu.memory_space<vmem>>, %arg6: memref<128x64xbf16, #tpu.memory_space<vmem>>, %arg7: memref<64x32xbf16, #tpu.memory_space<vmem>>, %arg8: memref<8x32xbf16, #tpu.memory_space<vmem>>, %arg9: memref<8x128xf32, #tpu.memory_space<vmem>>, %arg10: memref<1x1x128xf32, #tpu.memory_space<vmem>>) attributes {dimension_semantics = [#tpu.dimension_semantics<parallel>], iteration_bounds = array<i64: 2>, scalar_prefetch = 0 : i64, scratch_operands = 0 : i64, tpu.core_type = #tpu.core_type<tc>, window_params = [{transform_indices = @transform_0, window_bounds = array<i64: 128, 4>}, {transform_indices = @transform_1, window_bounds = array<i64: 128, 16>}, {pipeline_mode = #tpu.pipeline_mode<synchronous>, transform_indices = @transform_2, window_bounds = array<i64: 64, 64>}, {pipeline_mode = #tpu.pipeline_mode<synchronous>, transform_indices = @transform_3, window_bounds = array<i64: 64, 128>}, {pipeline_mode = #tpu.pipeline_mode<synchronous>, transform_indices = @transform_4, window_bounds = array<i64: 16, 128>}, {pipeline_mode = #tpu.pipeline_mode<synchronous>, transform_indices = @transform_5, window_bounds = array<i64: 128, 64>}, {pipeline_mode = #tpu.pipeline_mode<synchronous>, transform_indices = @transform_6, window_bounds = array<i64: 64, 32>}, {pipeline_mode = #tpu.pipeline_mode<synchronous>, transform_indices = @transform_7, window_bounds = array<i64: 8, 32>}, {pipeline_mode = #tpu.pipeline_mode<synchronous>, transform_indices = @transform_8, window_bounds = array<i64: 8, 128>}, {transform_indices = @transform_9, window_bounds = array<i64: 1, 1, 128>}]} {
    %c0 = arith.constant 0 : index
    %c0_0 = arith.constant 0 : index
    %0 = vector.load %arg9[%c0, %c0_0] : memref<8x128xf32, #tpu.memory_space<vmem>>, vector<8x128xf32>
    %1 = vector.extract_strided_slice %0 {offsets = [0, 0], sizes = [1, 64], strides = [1, 1]} : vector<8x128xf32> to vector<1x64xf32>
    %2 = vector.extract_strided_slice %0 {offsets = [1, 0], sizes = [1, 128], strides = [1, 1]} : vector<8x128xf32> to vector<1x128xf32>
    %3 = vector.extract_strided_slice %0 {offsets = [2, 0], sizes = [1, 64], strides = [1, 1]} : vector<8x128xf32> to vector<1x64xf32>
    %4 = vector.extract_strided_slice %0 {offsets = [3, 0], sizes = [1, 32], strides = [1, 1]} : vector<8x128xf32> to vector<1x32xf32>
    %5 = vector.extract_strided_slice %0 {offsets = [4, 0], sizes = [1, 1], strides = [1, 1]} : vector<8x128xf32> to vector<1x1xf32>
    %c0_1 = arith.constant 0 : index
    %c0_2 = arith.constant 0 : index
    %6 = vector.load %arg1[%c0_1, %c0_2] : memref<128x4xi32, #tpu.memory_space<vmem>>, vector<128x4xi32>
    %7 = tpu.iota {dimensions = array<i32: 1>} : vector<128x64xi32>
    %8 = vector.extract_strided_slice %6 {offsets = [0, 0], sizes = [128, 1], strides = [1, 1]} : vector<128x4xi32> to vector<128x1xi32>
    %9 = vector.broadcast %8 : vector<128x1xi32> to vector<128x64xi32>
    %10 = arith.cmpi eq, %7, %9 : vector<128x64xi32>
    %11 = arith.extui %10 : vector<128x64xi1> to vector<128x64xi32>
    %12 = arith.sitofp %11 : vector<128x64xi32> to vector<128x64xf32>
    %13 = arith.truncf %12 : vector<128x64xf32> to vector<128x64xbf16>
    %14 = vector.extract_strided_slice %6 {offsets = [0, 1], sizes = [128, 1], strides = [1, 1]} : vector<128x4xi32> to vector<128x1xi32>
    %15 = vector.broadcast %14 : vector<128x1xi32> to vector<128x64xi32>
    %16 = arith.cmpi eq, %7, %15 : vector<128x64xi32>
    %17 = arith.extui %16 : vector<128x64xi1> to vector<128x64xi32>
    %18 = arith.sitofp %17 : vector<128x64xi32> to vector<128x64xf32>
    %19 = arith.truncf %18 : vector<128x64xf32> to vector<128x64xbf16>
    %20 = arith.addf %13, %19 : vector<128x64xbf16>
    %21 = vector.extract_strided_slice %6 {offsets = [0, 2], sizes = [128, 1], strides = [1, 1]} : vector<128x4xi32> to vector<128x1xi32>
    %22 = vector.broadcast %21 : vector<128x1xi32> to vector<128x64xi32>
    %23 = arith.cmpi eq, %7, %22 : vector<128x64xi32>
    %24 = arith.extui %23 : vector<128x64xi1> to vector<128x64xi32>
    %25 = arith.sitofp %24 : vector<128x64xi32> to vector<128x64xf32>
    %26 = arith.truncf %25 : vector<128x64xf32> to vector<128x64xbf16>
    %27 = arith.addf %20, %26 : vector<128x64xbf16>
    %28 = vector.extract_strided_slice %6 {offsets = [0, 3], sizes = [128, 1], strides = [1, 1]} : vector<128x4xi32> to vector<128x1xi32>
    %29 = vector.broadcast %28 : vector<128x1xi32> to vector<128x64xi32>
    %30 = arith.cmpi eq, %7, %29 : vector<128x64xi32>
    %31 = arith.extui %30 : vector<128x64xi1> to vector<128x64xi32>
    %32 = arith.sitofp %31 : vector<128x64xi32> to vector<128x64xf32>
    %33 = arith.truncf %32 : vector<128x64xf32> to vector<128x64xbf16>
    %34 = arith.addf %27, %33 : vector<128x64xbf16>
    %c0_3 = arith.constant 0 : index
    %c0_4 = arith.constant 0 : index
    %35 = vector.load %arg3[%c0_3, %c0_4] : memref<64x64xbf16, #tpu.memory_space<vmem>>, vector<64x64xbf16>
    %cst = arith.constant dense<0.000000e+00> : vector<128x64xf32>
    %36 = tpu.matmul %34, %35, %cst {dimension_numbers = #tpu.dot_dimension_numbers<[1], [0], [0], [1], [0, 0, 1, 1], [], []>} : vector<128x64xbf16>, vector<64x64xbf16>, vector<128x64xf32> -> vector<128x64xf32>
    %37 = vector.broadcast %1 : vector<1x64xf32> to vector<128x64xf32>
    %38 = arith.addf %36, %37 : vector<128x64xf32>
    %cst_5 = arith.constant dense<0.000000e+00> : vector<128xf32>
    %39 = vector.multi_reduction <add>, %38, %cst_5 [1] : vector<128x64xf32> to vector<128xf32>
    %40 = vector.shape_cast %39 : vector<128xf32> to vector<128x1xf32>
    %cst_6 = arith.constant 6.400000e+01 : f32
    %41 = vector.broadcast %cst_6 : f32 to vector<128x1xf32>
    %42 = arith.divf %40, %41 : vector<128x1xf32>
    %43 = arith.mulf %38, %38 : vector<128x64xf32>
    %cst_7 = arith.constant dense<0.000000e+00> : vector<128xf32>
    %44 = vector.multi_reduction <add>, %43, %cst_7 [1] : vector<128x64xf32> to vector<128xf32>
    %45 = vector.shape_cast %44 : vector<128xf32> to vector<128x1xf32>
    %cst_8 = arith.constant 6.400000e+01 : f32
    %46 = vector.broadcast %cst_8 : f32 to vector<128x1xf32>
    %47 = arith.divf %45, %46 : vector<128x1xf32>
    %48 = vector.broadcast %42 : vector<128x1xf32> to vector<128x64xf32>
    %49 = arith.subf %38, %48 : vector<128x64xf32>
    %50 = arith.mulf %42, %42 : vector<128x1xf32>
    %51 = arith.subf %47, %50 : vector<128x1xf32>
    %cst_9 = arith.constant 9.99999974E-6 : f32
    %52 = vector.broadcast %cst_9 : f32 to vector<128x1xf32>
    %53 = arith.addf %51, %52 : vector<128x1xf32>
    %54 = math.rsqrt %53 : vector<128x1xf32>
    %55 = vector.broadcast %54 : vector<128x1xf32> to vector<128x64xf32>
    %56 = arith.mulf %49, %55 : vector<128x64xf32>
    %57 = arith.truncf %56 : vector<128x64xf32> to vector<128x64xbf16>
    %c0_10 = arith.constant 0 : index
    %c0_11 = arith.constant 0 : index
    %58 = vector.load %arg4[%c0_10, %c0_11] : memref<64x128xbf16, #tpu.memory_space<vmem>>, vector<64x128xbf16>
    %cst_12 = arith.constant dense<0.000000e+00> : vector<128x128xf32>
    %59 = tpu.matmul %57, %58, %cst_12 {dimension_numbers = #tpu.dot_dimension_numbers<[1], [0], [0], [1], [0, 0, 1, 1], [], []>} : vector<128x64xbf16>, vector<64x128xbf16>, vector<128x128xf32> -> vector<128x128xf32>
    %c0_13 = arith.constant 0 : index
    %c0_14 = arith.constant 0 : index
    %60 = vector.load %arg2[%c0_13, %c0_14] : memref<128x16xf32, #tpu.memory_space<vmem>>, vector<128x16xf32>
    %61 = arith.truncf %60 : vector<128x16xf32> to vector<128x16xbf16>
    %c0_15 = arith.constant 0 : index
    %c0_16 = arith.constant 0 : index
    %62 = vector.load %arg5[%c0_15, %c0_16] : memref<16x128xbf16, #tpu.memory_space<vmem>>, vector<16x128xbf16>
    %cst_17 = arith.constant dense<0.000000e+00> : vector<128x128xf32>
    %63 = tpu.matmul %61, %62, %cst_17 {dimension_numbers = #tpu.dot_dimension_numbers<[1], [0], [0], [1], [0, 0, 1, 1], [], []>} : vector<128x16xbf16>, vector<16x128xbf16>, vector<128x128xf32> -> vector<128x128xf32>
    %64 = arith.addf %59, %63 : vector<128x128xf32>
    %65 = vector.broadcast %2 : vector<1x128xf32> to vector<128x128xf32>
    %66 = arith.addf %64, %65 : vector<128x128xf32>
    %67 = arith.negf %66 : vector<128x128xf32>
    %68 = math.exp %67 : vector<128x128xf32>
    %cst_18 = arith.constant 1.000000e+00 : f32
    %69 = vector.broadcast %cst_18 : f32 to vector<128x128xf32>
    %70 = arith.addf %69, %68 : vector<128x128xf32>
    %71 = arith.divf %69, %70 : vector<128x128xf32>
    %72 = arith.mulf %66, %71 : vector<128x128xf32>
    %73 = arith.truncf %72 : vector<128x128xf32> to vector<128x128xbf16>
    %c0_19 = arith.constant 0 : index
    %c0_20 = arith.constant 0 : index
    %74 = vector.load %arg6[%c0_19, %c0_20] : memref<128x64xbf16, #tpu.memory_space<vmem>>, vector<128x64xbf16>
    %cst_21 = arith.constant dense<0.000000e+00> : vector<128x64xf32>
    %75 = tpu.matmul %73, %74, %cst_21 {dimension_numbers = #tpu.dot_dimension_numbers<[1], [0], [0], [1], [0, 0, 1, 1], [], []>} : vector<128x128xbf16>, vector<128x64xbf16>, vector<128x64xf32> -> vector<128x64xf32>
    %76 = vector.broadcast %3 : vector<1x64xf32> to vector<128x64xf32>
    %77 = arith.addf %75, %76 : vector<128x64xf32>
    %78 = arith.negf %77 : vector<128x64xf32>
    %79 = math.exp %78 : vector<128x64xf32>
    %cst_22 = arith.constant 1.000000e+00 : f32
    %80 = vector.broadcast %cst_22 : f32 to vector<128x64xf32>
    %81 = arith.addf %80, %79 : vector<128x64xf32>
    %82 = arith.divf %80, %81 : vector<128x64xf32>
    %83 = arith.mulf %77, %82 : vector<128x64xf32>
    %84 = arith.truncf %83 : vector<128x64xf32> to vector<128x64xbf16>
    %c0_23 = arith.constant 0 : index
    %c0_24 = arith.constant 0 : index
    %85 = vector.load %arg7[%c0_23, %c0_24] : memref<64x32xbf16, #tpu.memory_space<vmem>>, vector<64x32xbf16>
    %cst_25 = arith.constant dense<0.000000e+00> : vector<128x32xf32>
    %86 = tpu.matmul %84, %85, %cst_25 {dimension_numbers = #tpu.dot_dimension_numbers<[1], [0], [0], [1], [0, 0, 1, 1], [], []>} : vector<128x64xbf16>, vector<64x32xbf16>, vector<128x32xf32> -> vector<128x32xf32>
    %87 = vector.broadcast %4 : vector<1x32xf32> to vector<128x32xf32>
    %88 = arith.addf %86, %87 : vector<128x32xf32>
    %89 = arith.negf %88 : vector<128x32xf32>
    %90 = math.exp %89 : vector<128x32xf32>
    %cst_26 = arith.constant 1.000000e+00 : f32
    %91 = vector.broadcast %cst_26 : f32 to vector<128x32xf32>
    %92 = arith.addf %91, %90 : vector<128x32xf32>
    %93 = arith.divf %91, %92 : vector<128x32xf32>
    %94 = arith.mulf %88, %93 : vector<128x32xf32>
    %c0_27 = arith.constant 0 : index
    %c0_28 = arith.constant 0 : index
    %95 = vector.load %arg8[%c0_27, %c0_28] : memref<8x32xbf16, #tpu.memory_space<vmem>>, vector<8x32xbf16>
    %96 = arith.truncf %94 : vector<128x32xf32> to vector<128x32xbf16>
    %cst_29 = arith.constant dense<0.000000e+00> : vector<8x128xf32>
    %97 = tpu.matmul %95, %96, %cst_29 {dimension_numbers = #tpu.dot_dimension_numbers<[1], [1], [0], [0], [0, 0, 1, 0], [], []>} : vector<8x32xbf16>, vector<128x32xbf16>, vector<8x128xf32> -> vector<8x128xf32>
    %98 = vector.extract_strided_slice %97 {offsets = [0, 0], sizes = [1, 128], strides = [1, 1]} : vector<8x128xf32> to vector<1x128xf32>
    %99 = vector.broadcast %5 : vector<1x1xf32> to vector<1x128xf32>
    %100 = arith.addf %98, %99 : vector<1x128xf32>
    %c0_30 = arith.constant 0 : index
    %c0_31 = arith.constant 0 : index
    %c0_32 = arith.constant 0 : index
    %101 = vector.load %arg10[%c0_30, %c0_31, %c0_32] : memref<1x1x128xf32, #tpu.memory_space<vmem>>, vector<1x1x128xf32>
    %102 = vector.shape_cast %101 : vector<1x1x128xf32> to vector<1x128xf32>
    %103 = vector.shape_cast %100 : vector<1x128xf32> to vector<1x1x128xf32>
    tpu.vector_store %arg10[%c0_30, %c0_31, %c0_32], %103 {strides = array<i32>} : memref<1x1x128xf32, #tpu.memory_space<vmem>>, vector<1x1x128xf32>,
    return
  }
  func.func @transform_0(%arg0: i32) -> (i32, i32) {
    %c0_i32 = arith.constant 0 : i32
    %c0_i32_0 = arith.constant 0 : i32
    return %arg0, %c0_i32 : i32, i32
  }
  func.func @transform_1(%arg0: i32) -> (i32, i32) {
    %c0_i32 = arith.constant 0 : i32
    %c0_i32_0 = arith.constant 0 : i32
    return %arg0, %c0_i32 : i32, i32
  }
  func.func @transform_2(%arg0: i32) -> (i32, i32) {
    %c0_i32 = arith.constant 0 : i32
    %c0_i32_0 = arith.constant 0 : i32
    %c0_i32_1 = arith.constant 0 : i32
    return %c0_i32, %c0_i32_0 : i32, i32
  }
  func.func @transform_3(%arg0: i32) -> (i32, i32) {
    %c0_i32 = arith.constant 0 : i32
    %c0_i32_0 = arith.constant 0 : i32
    %c0_i32_1 = arith.constant 0 : i32
    return %c0_i32, %c0_i32_0 : i32, i32
  }
  func.func @transform_4(%arg0: i32) -> (i32, i32) {
    %c0_i32 = arith.constant 0 : i32
    %c0_i32_0 = arith.constant 0 : i32
    %c0_i32_1 = arith.constant 0 : i32
    return %c0_i32, %c0_i32_0 : i32, i32
  }
  func.func @transform_5(%arg0: i32) -> (i32, i32) {
    %c0_i32 = arith.constant 0 : i32
    %c0_i32_0 = arith.constant 0 : i32
    %c0_i32_1 = arith.constant 0 : i32
    return %c0_i32, %c0_i32_0 : i32, i32
  }
  func.func @transform_6(%arg0: i32) -> (i32, i32) {
    %c0_i32 = arith.constant 0 : i32
    %c0_i32_0 = arith.constant 0 : i32
    %c0_i32_1 = arith.constant 0 : i32
    return %c0_i32, %c0_i32_0 : i32, i32
  }
  func.func @transform_7(%arg0: i32) -> (i32, i32) {
    %c0_i32 = arith.constant 0 : i32
    %c0_i32_0 = arith.constant 0 : i32
    %c0_i32_1 = arith.constant 0 : i32
    return %c0_i32, %c0_i32_0 : i32, i32
  }
  func.func @transform_8(%arg0: i32) -> (i32, i32) {
    %c0_i32 = arith.constant 0 : i32
    %c0_i32_0 = arith.constant 0 : i32
    %c0_i32_1 = arith.constant 0 : i32
    return %c0_i32, %c0_i32_0 : i32, i32
  }
  func.func @transform_9(%arg0: i32) -> (i32, i32, i32) {
    %c0_i32 = arith.constant 0 : i32
    %c0_i32_0 = arith.constant 0 : i32
    %c0_i32_1 = arith.constant 0 : i32
    return %arg0, %c0_i32, %c0_i32_0 : i32, i32, i32
  }
}

</mosaic_0001>

<llo_original>
// kernel: model_forward.1
$region0: #{model_forward.1}
  #allocation0 [shape = 'u32[]', space=smem, size = 0x4, offset = 0x4, fixed_abs, tag = 'smem constant byte address 0x4 - core index']
  #allocation1 [shape = 'u32[144,128]{1,0:T(1,128)}', space=vmem, size = 0x12000, scoped, tag = 'internal scratch']
  %s0 = inlined_call_operand.vmem [shape: s32[256,4], index: 0, kind: input, shape index: {}]
  %s1 = inlined_call_operand.vmem [shape: f32[256,16], index: 1, kind: input, shape index: {}]
  %s2 = inlined_call_operand.vmem [shape: bf16[64,64], index: 2, kind: input, shape index: {}]
  %s3 = inlined_call_operand.vmem [shape: bf16[64,128], index: 3, kind: input, shape index: {}]
  %s4 = inlined_call_operand.vmem [shape: bf16[16,128], index: 4, kind: input, shape index: {}]
  %s5 = inlined_call_operand.vmem [shape: bf16[128,64], index: 5, kind: input, shape index: {}]
  %s6 = inlined_call_operand.vmem [shape: bf16[64,32], index: 6, kind: input, shape index: {}]
  %s7 = inlined_call_operand.vmem [shape: bf16[8,32], index: 7, kind: input, shape index: {}]
  %s8 = inlined_call_operand.vmem [shape: f32[8,128], index: 8, kind: input, shape index: {}]
  %s9 = inlined_call_operand.hbm [shape: f32[2,1,128], index: 9, kind: output, shape index: {}]
  %s10 = sld [smem:[#allocation0]]
  $region69: #{model_forward.1} parent=0
    _
  %s12 = ssub.s32 1, %s10
  %s13 = scalar_select 0, %s12, %s10
  $region1: #{model_forward.1} parent=0
    #allocation2 [shape = 'u8[1024]{0}', space=vmem, size = 0x400, scoped, tag = 'output window, operand 0']
    #allocation3 [shape = 's32[2]{0}', space=sflag, size = 0x8, scoped, tag = 'scoped memory for model_forward.1']
    %14 = vsyncpa [#allocation3], 0
    %s15 = scalar_lea.sflag [#allocation3], 1
    %16 = vsyncpa %s15, 0
    loop: start=0, step=1, limit=4
    $region2: #{model_forward.1} parent=1 // loop_pre_header
      _
    $region3: #{model_forward.1} parent=1 // loop_header
      %s18 = sphi 0, %s22
      %p19 = scmp.ge.s32.totalorder %s18, 4
      %s28 = sphi 0, %s30
      %s31 = sphi 0, %s28
      %s32 = sphi 0, %s31
      %s48 = sphi 0, %s32
      %s54 = sphi 0, %s56
      %s57 = sphi 0, %s54
      %s58 = sphi 0, %s57
      %s74 = sphi 0, %s58
      %s78 = sphi 0, %s78
      %s80 = sphi 0, %s78
      %s81 = sphi 0, %s80
      %s95 = sphi 0, %s81
      %s99 = sphi 0, %s99
      %s101 = sphi 0, %s99
      %s102 = sphi 0, %s101
      %s116 = sphi 0, %s102
      %s120 = sphi 0, %s120
      %s122 = sphi 0, %s120
      %s123 = sphi 0, %s122
      %s137 = sphi 0, %s123
      %s141 = sphi 0, %s141
      %s143 = sphi 0, %s141
      %s144 = sphi 0, %s143
      %s158 = sphi 0, %s144
      %s162 = sphi 0, %s162
      %s164 = sphi 0, %s162
      %s165 = sphi 0, %s164
      %s179 = sphi 0, %s165
      %s183 = sphi 0, %s183
      %s185 = sphi 0, %s183
      %s186 = sphi 0, %s185
      %s200 = sphi 0, %s186
      %s204 = sphi 0, %s204
      %s206 = sphi 0, %s204
      %s207 = sphi 0, %s206
      %s221 = sphi 0, %s207
      %s227 = sphi 0, %s229
      %s230 = sphi 0, %s227
      %s231 = sphi 0, %s230
      %s247 = sphi 0, %s231
    $region4: #{model_forward.1} parent=1 // loop_header_branch
      %21 = sbr.rel (%p19) target = $region8
    $region5: #{model_forward.1} parent=1 // loop_body
      %s23 = ssub.s32 %s18, 1
      %s24 = ssub.s32 %s18, 2
      %s25 = sadd.s32 %s18, 1
      %s26 = ssub.s32 %s18, %s25
      %p27 = scmp.eq.s32.totalorder %s26, 0
      %s29 = sadd.s32 %s28, 1
      %s30 = scalar_select %p27, %s28, %s29
      %p33 = pneg %p27
      %p34 = scmp.eq.s32.totalorder %s18, 1
      %p35 = por %p33, %p34
      %p36 = scmp.ne.s32.totalorder %s28, %s31
      %p37 = scmp.eq.s32.totalorder %s18, 0
      %p38 = por %p36, %p37
      %p39 = scmp.ne.s32.totalorder %s28, %s31
      %p40 = scmp.eq.s32.totalorder %s23, 1
      %p41 = por %p39, %p40
      %p42 = scmp.ne.s32.totalorder %s31, %s32
      %p43 = scmp.eq.s32.totalorder %s23, 0
      %p44 = por %p42, %p43
      %p45 = scmp.ne.s32.totalorder %s31, %s32
      %p46 = scmp.eq.s32.totalorder %s24, 1
      %p47 = por %p45, %p46
      %p49 = scmp.ne.s32.totalorder %s32, %s48
      %p50 = scmp.eq.s32.totalorder %s24, 0
      %p51 = por %p49, %p50
      %s52 = ssub.s32 %s18, %s25
      %p53 = scmp.eq.s32.totalorder %s52, 0
      %s55 = sadd.s32 %s54, 1
      %s56 = scalar_select %p53, %s54, %s55
      %p59 = pneg %p53
      %p60 = scmp.eq.s32.totalorder %s18, 1
      %p61 = por %p59, %p60
      %p62 = scmp.ne.s32.totalorder %s54, %s57
      %p63 = scmp.eq.s32.totalorder %s18, 0
      %p64 = por %p62, %p63
      %p65 = scmp.ne.s32.totalorder %s54, %s57
      %p66 = scmp.eq.s32.totalorder %s23, 1
      %p67 = por %p65, %p66
      %p68 = scmp.ne.s32.totalorder %s57, %s58
      %p69 = scmp.eq.s32.totalorder %s23, 0
      %p70 = por %p68, %p69
      %p71 = scmp.ne.s32.totalorder %s57, %s58
      %p72 = scmp.eq.s32.totalorder %s24, 1
      %p73 = por %p71, %p72
      %p75 = scmp.ne.s32.totalorder %s58, %s74
      %p76 = scmp.eq.s32.totalorder %s24, 0
      %p77 = por %p75, %p76
      %s79 = sadd.s32 %s78, 1
      %p82 = scmp.eq.s32.totalorder %s18, 1
      %p83 = scmp.ne.s32.totalorder %s78, %s80
      %p84 = scmp.eq.s32.totalorder %s18, 0
      %p85 = por %p83, %p84
      %p86 = scmp.ne.s32.totalorder %s78, %s80
      %p87 = scmp.eq.s32.totalorder %s23, 1
      %p88 = por %p86, %p87
      %p89 = scmp.ne.s32.totalorder %s80, %s81
      %p90 = scmp.eq.s32.totalorder %s23, 0
      %p91 = por %p89, %p90
      %p92 = scmp.ne.s32.totalorder %s80, %s81
      %p93 = scmp.eq.s32.totalorder %s24, 1
      %p94 = por %p92, %p93
      %p96 = scmp.ne.s32.totalorder %s81, %s95
      %p97 = scmp.eq.s32.totalorder %s24, 0
      %p98 = por %p96, %p97
      %s100 = sadd.s32 %s99, 1
      %p103 = scmp.eq.s32.totalorder %s18, 1
      %p104 = scmp.ne.s32.totalorder %s99, %s101
      %p105 = scmp.eq.s32.totalorder %s18, 0
      %p106 = por %p104, %p105
      %p107 = scmp.ne.s32.totalorder %s99, %s101
      %p108 = scmp.eq.s32.totalorder %s23, 1
      %p109 = por %p107, %p108
      %p110 = scmp.ne.s32.totalorder %s101, %s102
      %p111 = scmp.eq.s32.totalorder %s23, 0
      %p112 = por %p110, %p111
      %p113 = scmp.ne.s32.totalorder %s101, %s102
      %p114 = scmp.eq.s32.totalorder %s24, 1
      %p115 = por %p113, %p114
      %p117 = scmp.ne.s32.totalorder %s102, %s116
      %p118 = scmp.eq.s32.totalorder %s24, 0
      %p119 = por %p117, %p118
      %s121 = sadd.s32 %s120, 1
      %p124 = scmp.eq.s32.totalorder %s18, 1
      %p125 = scmp.ne.s32.totalorder %s120, %s122
      %p126 = scmp.eq.s32.totalorder %s18, 0
      %p127 = por %p125, %p126
      %p128 = scmp.ne.s32.totalorder %s120, %s122
      %p129 = scmp.eq.s32.totalorder %s23, 1
      %p130 = por %p128, %p129
      %p131 = scmp.ne.s32.totalorder %s122, %s123
      %p132 = scmp.eq.s32.totalorder %s23, 0
      %p133 = por %p131, %p132
      %p134 = scmp.ne.s32.totalorder %s122, %s123
      %p135 = scmp.eq.s32.totalorder %s24, 1
      %p136 = por %p134, %p135
      %p138 = scmp.ne.s32.totalorder %s123, %s137
      %p139 = scmp.eq.s32.totalorder %s24, 0
      %p140 = por %p138, %p139
      %s142 = sadd.s32 %s141, 1
      %p145 = scmp.eq.s32.totalorder %s18, 1
      %p146 = scmp.ne.s32.totalorder %s141, %s143
      %p147 = scmp.eq.s32.totalorder %s18, 0
      %p148 = por %p146, %p147
      %p149 = scmp.ne.s32.totalorder %s141, %s143
      %p150 = scmp.eq.s32.totalorder %s23, 1
      %p151 = por %p149, %p150
      %p152 = scmp.ne.s32.totalorder %s143, %s144
      %p153 = scmp.eq.s32.totalorder %s23, 0
      %p154 = por %p152, %p153
      %p155 = scmp.ne.s32.totalorder %s143, %s144
      %p156 = scmp.eq.s32.totalorder %s24, 1
      %p157 = por %p155, %p156
      %p159 = scmp.ne.s32.totalorder %s144, %s158
      %p160 = scmp.eq.s32.totalorder %s24, 0
      %p161 = por %p159, %p160
      %s163 = sadd.s32 %s162, 1
      %p166 = scmp.eq.s32.totalorder %s18, 1
      %p167 = scmp.ne.s32.totalorder %s162, %s164
      %p168 = scmp.eq.s32.totalorder %s18, 0
      %p169 = por %p167, %p168
      %p170 = scmp.ne.s32.totalorder %s162, %s164
      %p171 = scmp.eq.s32.totalorder %s23, 1
      %p172 = por %p170, %p171
      %p173 = scmp.ne.s32.totalorder %s164, %s165
      %p174 = scmp.eq.s32.totalorder %s23, 0
      %p175 = por %p173, %p174
      %p176 = scmp.ne.s32.totalorder %s164, %s165
      %p177 = scmp.eq.s32.totalorder %s24, 1
      %p178 = por %p176, %p177
      %p180 = scmp.ne.s32.totalorder %s165, %s179
      %p181 = scmp.eq.s32.totalorder %s24, 0
      %p182 = por %p180, %p181
      %s184 = sadd.s32 %s183, 1
      %p187 = scmp.eq.s32.totalorder %s18, 1
      %p188 = scmp.ne.s32.totalorder %s183, %s185
      %p189 = scmp.eq.s32.totalorder %s18, 0
      %p190 = por %p188, %p189
      %p191 = scmp.ne.s32.totalorder %s183, %s185
      %p192 = scmp.eq.s32.totalorder %s23, 1
      %p193 = por %p191, %p192
      %p194 = scmp.ne.s32.totalorder %s185, %s186
      %p195 = scmp.eq.s32.totalorder %s23, 0
      %p196 = por %p194, %p195
      %p197 = scmp.ne.s32.totalorder %s185, %s186
      %p198 = scmp.eq.s32.totalorder %s24, 1
      %p199 = por %p197, %p198
      %p201 = scmp.ne.s32.totalorder %s186, %s200
      %p202 = scmp.eq.s32.totalorder %s24, 0
      %p203 = por %p201, %p202
      %s205 = sadd.s32 %s204, 1
      %p208 = scmp.eq.s32.totalorder %s18, 1
      %p209 = scmp.ne.s32.totalorder %s204, %s206
      %p210 = scmp.eq.s32.totalorder %s18, 0
      %p211 = por %p209, %p210
      %p212 = scmp.ne.s32.totalorder %s204, %s206
      %p213 = scmp.eq.s32.totalorder %s23, 1
      %p214 = por %p212, %p213
      %p215 = scmp.ne.s32.totalorder %s206, %s207
      %p216 = scmp.eq.s32.totalorder %s23, 0
      %p217 = por %p215, %p216
      %p218 = scmp.ne.s32.totalorder %s206, %s207
      %p219 = scmp.eq.s32.totalorder %s24, 1
      %p220 = por %p218, %p219
      %p222 = scmp.ne.s32.totalorder %s207, %s221
      %p223 = scmp.eq.s32.totalorder %s24, 0
      %p224 = por %p222, %p223
      %s225 = ssub.s32 %s18, %s25
      %p226 = scmp.eq.s32.totalorder %s225, 0
      %s228 = sadd.s32 %s227, 1
      %s229 = scalar_select %p226, %s227, %s228
      %p232 = pneg %p226
      %p233 = scmp.eq.s32.totalorder %s18, 1
      %p234 = por %p232, %p233
      %p235 = scmp.ne.s32.totalorder %s227, %s230
      %p236 = scmp.eq.s32.totalorder %s18, 0
      %p237 = por %p235, %p236
      %p238 = scmp.ne.s32.totalorder %s227, %s230
      %p239 = scmp.eq.s32.totalorder %s23, 1
      %p240 = por %p238, %p239
      %p241 = scmp.ne.s32.totalorder %s230, %s231
      %p242 = scmp.eq.s32.totalorder %s23, 0
      %p243 = por %p241, %p242
      %p244 = scmp.ne.s32.totalorder %s230, %s231
      %p245 = scmp.eq.s32.totalorder %s24, 1
      %p246 = por %p244, %p245
      %p248 = scmp.ne.s32.totalorder %s231, %s247
      %p249 = scmp.eq.s32.totalorder %s24, 0
      %p250 = por %p248, %p249
      %p251 = scmp.le.s32.totalorder 1, %s18
      %p252 = scmp.lt.s32.totalorder %s18, 3
      %p253 = pnand %p251, %p252
      %p254 = pneg %p253
      // Predicated region
      $region9: #{model_forward.1} parent=5 // pred_check
        _
      $region10: #{model_forward.1} parent=5 // pred_check_branch
        %256 = sbr.rel (%p253) target = $region12
      $region11: #{model_forward.1} parent=5 // pred_region
        %s257 = ssub.s32 %s18, 1
        // Predicated region
        $region13: #{model_forward.1} parent=11 // pred_check
          %p258 = pneg %p91
        $region14: #{model_forward.1} parent=11 // pred_check_branch
          %260 = sbr.rel (%p258) target = $region16
        $region15: #{model_forward.1} parent=11 // pred_region
          _
        $region16: #{model_forward.1} parent=11 // pred_fallthru
          _
        // Predicated region
        $region17: #{model_forward.1} parent=11 // pred_check
          %p261 = pneg %p112
        $region18: #{model_forward.1} parent=11 // pred_check_branch
          %263 = sbr.rel (%p261) target = $region20
        $region19: #{model_forward.1} parent=11 // pred_region
          _
        $region20: #{model_forward.1} parent=11 // pred_fallthru
          _
        // Predicated region
        $region21: #{model_forward.1} parent=11 // pred_check
          %p264 = pneg %p133
        $region22: #{model_forward.1} parent=11 // pred_check_branch
          %266 = sbr.rel (%p264) target = $region24
        $region23: #{model_forward.1} parent=11 // pred_region
          _
        $region24: #{model_forward.1} parent=11 // pred_fallthru
          _
        // Predicated region
        $region25: #{model_forward.1} parent=11 // pred_check
          %p267 = pneg %p154
        $region26: #{model_forward.1} parent=11 // pred_check_branch
          %269 = sbr.rel (%p267) target = $region28
        $region27: #{model_forward.1} parent=11 // pred_region
          _
        $region28: #{model_forward.1} parent=11 // pred_fallthru
          _
        // Predicated region
        $region29: #{model_forward.1} parent=11 // pred_check
          %p270 = pneg %p175
        $region30: #{model_forward.1} parent=11 // pred_check_branch
          %272 = sbr.rel (%p270) target = $region32
        $region31: #{model_forward.1} parent=11 // pred_region
          _
        $region32: #{model_forward.1} parent=11 // pred_fallthru
          _
        // Predicated region
        $region33: #{model_forward.1} parent=11 // pred_check
          %p273 = pneg %p196
        $region34: #{model_forward.1} parent=11 // pred_check_branch
          %275 = sbr.rel (%p273) target = $region36
        $region35: #{model_forward.1} parent=11 // pred_region
          _
        $region36: #{model_forward.1} parent=11 // pred_fallthru
          _
        // Predicated region
        $region37: #{model_forward.1} parent=11 // pred_check
          %p276 = pneg %p217
        $region38: #{model_forward.1} parent=11 // pred_check_branch
          %278 = sbr.rel (%p276) target = $region40
        $region39: #{model_forward.1} parent=11 // pred_region
          _
        $region40: #{model_forward.1} parent=11 // pred_fallthru
          _
      $region12: #{model_forward.1} parent=5 // pred_fallthru
        _
      %p279 = scmp.lt.s32.totalorder %s18, 2
      // Predicated region
      $region41: #{model_forward.1} parent=5 // pred_check
        %p280 = pneg %p279
      $region42: #{model_forward.1} parent=5 // pred_check_branch
        %282 = sbr.rel (%p280) target = $region44
      $region43: #{model_forward.1} parent=5 // pred_region
        // Predicated region
        $region45: #{model_forward.1} parent=43 // pred_check
          %p283 = pneg %p38
        $region46: #{model_forward.1} parent=43 // pred_check_branch
          %285 = sbr.rel (%p283) target = $region48
        $region47: #{model_forward.1} parent=43 // pred_region
          %s286 = smul.u32 16, %s18
          %p287 = scmp.lt.s32.totalorder %s286, 31
          %s288 = scalar_select %p287, %s286, 31
          %s289 = smul.addr %s288, 8
          %s290 = scalar_lea.vmem %s0, %s289
          %s291 = smul.u32 16, %s18
        $region48: #{model_forward.1} parent=43 // pred_fallthru
          _
        // Predicated region
        $region49: #{model_forward.1} parent=43 // pred_check
          %p292 = pneg %p64
        $region50: #{model_forward.1} parent=43 // pred_check_branch
          %294 = sbr.rel (%p292) target = $region52
        $region51: #{model_forward.1} parent=43 // pred_region
          %s295 = smul.u32 16, %s18
          %p296 = scmp.lt.s32.totalorder %s295, 31
          %s297 = scalar_select %p296, %s295, 31
          %s298 = smul.addr %s297, 8
          %s299 = scalar_lea.vmem %s1, %s298
          %s300 = smul.u32 16, %s18
        $region52: #{model_forward.1} parent=43 // pred_fallthru
          _
      $region44: #{model_forward.1} parent=5 // pred_fallthru
        _
      %p301 = scmp.le.s32.totalorder 1, %s18
      %p302 = scmp.lt.s32.totalorder %s18, 3
      %p303 = pnand %p301, %p302
      %p304 = pneg %p303
      // Predicated region
      $region53: #{model_forward.1} parent=5 // pred_check
        _
      $region54: #{model_forward.1} parent=5 // pred_check_branch
        %306 = sbr.rel (%p303) target = $region56
      $region55: #{model_forward.1} parent=5 // pred_region
        %s307 = ssub.s32 %s18, 1
        %s308 = smul.u32 16, %s23
        %p309 = scmp.lt.s32.totalorder %s308, 31
        %s310 = scalar_select %p309, %s308, 31
        %s311 = smul.addr %s310, 8
        %s312 = scalar_lea.vmem %s0, %s311
        %p313 = pneg %p44
        %p314 = pneg %p41
        %s315 = smul.u32 16, %s23
        %p316 = scmp.lt.s32.totalorder %s315, 31
        %s317 = scalar_select %p316, %s315, 31
        %s318 = smul.addr %s317, 8
        %s319 = scalar_lea.vmem %s1, %s318
        %p320 = pneg %p70
        %p321 = pneg %p67
        %p322 = pneg %p91
        %p323 = pneg %p88
        %p324 = pneg %p112
        %p325 = pneg %p109
        %p326 = pneg %p133
        %p327 = pneg %p130
        %p328 = pneg %p154
        %p329 = pneg %p151
        %p330 = pneg %p175
        %p331 = pneg %p172
        %p332 = pneg %p196
        %p333 = pneg %p193
        %p334 = pneg %p217
        %p335 = pneg %p214
        %p336 = pneg %p243
        %p337 = pneg %p240
        %s338 = sand.u32 %s230, 1
        %s339 = scalar_lea.sflag [#allocation3], %s338
        %s340 = sand.u32 %s230, 1
        %s341 = scalar_lea.vmem [#allocation2], %s340
        %s342 = smul.u32 16, %s23
        %p343 = scmp.lt.s32.totalorder %s342, 31
        %s344 = scalar_select %p343, %s342, 31
        %s345 = smul.addr %s344, 8
        %s346 = scalar_lea.vmem %s0, %s345
        %s347 = smul.u32 16, %s23
        %s348 = smul.u32 16, %s23
        %p349 = scmp.lt.s32.totalorder %s348, 31
        %s350 = scalar_select %p349, %s348, 31
        %s351 = smul.addr %s350, 8
        %s352 = scalar_lea.vmem %s1, %s351
        %s353 = smul.u32 16, %s23
        %v355 = vld [vmem:[%s8] sm:$0xff]
        %v356 = vld [vmem:[%s346] sm:$0xff]
        %v357 = vld [vmem:[%s346 + $0x8] sm:$0xff]
        %v358 = vld [vmem:[%s346 + $0x10] sm:$0xff]
        %v359 = vld [vmem:[%s346 + $0x18] sm:$0xff]
        %v360 = vld [vmem:[%s346 + $0x20] sm:$0xff]
        %v361 = vld [vmem:[%s346 + $0x28] sm:$0xff]
        %v362 = vld [vmem:[%s346 + $0x30] sm:$0xff]
        %v363 = vld [vmem:[%s346 + $0x38] sm:$0xff]
        %v364 = vld [vmem:[%s346 + $0x40] sm:$0xff]
        %v365 = vld [vmem:[%s346 + $0x48] sm:$0xff]
        %v366 = vld [vmem:[%s346 + $0x50] sm:$0xff]
        %v367 = vld [vmem:[%s346 + $0x58] sm:$0xff]
        %v368 = vld [vmem:[%s346 + $0x60] sm:$0xff]
        %v369 = vld [vmem:[%s346 + $0x68] sm:$0xff]
        %v370 = vld [vmem:[%s346 + $0x70] sm:$0xff]
        %v371 = vld [vmem:[%s346 + $0x78] sm:$0xff]
        %v372 = vlaneseq
        %v373 = vand.u32 %v372, 127
        %374 = vset.pattern.permute.xlu0 0
        %375 = vperm.xlu0 %374, %v356
        %v376 = vpop.permute.xlu0 %375
        %377 = vset.pattern.permute.xlu0 0
        %378 = vperm.xlu0 %377, %v357
        %v379 = vpop.permute.xlu0 %378
        %380 = vset.pattern.permute.xlu0 0
        %381 = vperm.xlu0 %380, %v358
        %v382 = vpop.permute.xlu0 %381
        %383 = vset.pattern.permute.xlu0 0
        %384 = vperm.xlu0 %383, %v359
        %v385 = vpop.permute.xlu0 %384
        %386 = vset.pattern.permute.xlu0 0
        %387 = vperm.xlu0 %386, %v360
        %v388 = vpop.permute.xlu0 %387
        %389 = vset.pattern.permute.xlu0 0
        %390 = vperm.xlu0 %389, %v361
        %v391 = vpop.permute.xlu0 %390
        %392 = vset.pattern.permute.xlu0 0
        %393 = vperm.xlu0 %392, %v362
        %v394 = vpop.permute.xlu0 %393
        %395 = vset.pattern.permute.xlu0 0
        %396 = vperm.xlu0 %395, %v363
        %v397 = vpop.permute.xlu0 %396
        %398 = vset.pattern.permute.xlu0 0
        %399 = vperm.xlu0 %398, %v364
        %v400 = vpop.permute.xlu0 %399
        %401 = vset.pattern.permute.xlu0 0
        %402 = vperm.xlu0 %401, %v365
        %v403 = vpop.permute.xlu0 %402
        %404 = vset.pattern.permute.xlu0 0
        %405 = vperm.xlu0 %404, %v366
        %v406 = vpop.permute.xlu0 %405
        %407 = vset.pattern.permute.xlu0 0
        %408 = vperm.xlu0 %407, %v367
        %v409 = vpop.permute.xlu0 %408
        %410 = vset.pattern.permute.xlu0 0
        %411 = vperm.xlu0 %410, %v368
        %v412 = vpop.permute.xlu0 %411
        %413 = vset.pattern.permute.xlu0 0
        %414 = vperm.xlu0 %413, %v369
        %v415 = vpop.permute.xlu0 %414
        %416 = vset.pattern.permute.xlu0 0
        %417 = vperm.xlu0 %416, %v370
        %v418 = vpop.permute.xlu0 %417
        %419 = vset.pattern.permute.xlu0 0
        %420 = vperm.xlu0 %419, %v371
        %v421 = vpop.permute.xlu0 %420
        %vm422 = vcmp.eq.s32.totalorder %v373, %v376
        %vm423 = vcmp.eq.s32.totalorder %v373, %v379
        %vm424 = vcmp.eq.s32.totalorder %v373, %v382
        %vm425 = vcmp.eq.s32.totalorder %v373, %v385
        %vm426 = vcmp.eq.s32.totalorder %v373, %v388
        %vm427 = vcmp.eq.s32.totalorder %v373, %v391
        %vm428 = vcmp.eq.s32.totalorder %v373, %v394
        %vm429 = vcmp.eq.s32.totalorder %v373, %v397
        %vm430 = vcmp.eq.s32.totalorder %v373, %v400
        %vm431 = vcmp.eq.s32.totalorder %v373, %v403
        %vm432 = vcmp.eq.s32.totalorder %v373, %v406
        %vm433 = vcmp.eq.s32.totalorder %v373, %v409
        %vm434 = vcmp.eq.s32.totalorder %v373, %v412
        %vm435 = vcmp.eq.s32.totalorder %v373, %v415
        %vm436 = vcmp.eq.s32.totalorder %v373, %v418
        %vm437 = vcmp.eq.s32.totalorder %v373, %v421
        %v438 = vsel %vm422, 1, 0
        %v439 = vsel %vm423, 1, 0
        %v440 = vsel %vm424, 1, 0
        %v441 = vsel %vm425, 1, 0
        %v442 = vsel %vm426, 1, 0
        %v443 = vsel %vm427, 1, 0
        %v444 = vsel %vm428, 1, 0
        %v445 = vsel %vm429, 1, 0
        %v446 = vsel %vm430, 1, 0
        %v447 = vsel %vm431, 1, 0
        %v448 = vsel %vm432, 1, 0
        %v449 = vsel %vm433, 1, 0
        %v450 = vsel %vm434, 1, 0
        %v451 = vsel %vm435, 1, 0
        %v452 = vsel %vm436, 1, 0
        %v453 = vsel %vm437, 1, 0
        %v454 = vcvt.s32.f32 %v438
        %v455 = vcvt.s32.f32 %v439
        %v456 = vcvt.s32.f32 %v440
        %v457 = vcvt.s32.f32 %v441
        %v458 = vcvt.s32.f32 %v442
        %v459 = vcvt.s32.f32 %v443
        %v460 = vcvt.s32.f32 %v444
        %v461 = vcvt.s32.f32 %v445
        %v462 = vcvt.s32.f32 %v446
        %v463 = vcvt.s32.f32 %v447
        %v464 = vcvt.s32.f32 %v448
        %v465 = vcvt.s32.f32 %v449
        %v466 = vcvt.s32.f32 %v450
        %v467 = vcvt.s32.f32 %v451
        %v468 = vcvt.s32.f32 %v452
        %v469 = vcvt.s32.f32 %v453
        %v470 = vpack.c.bf16 %v455, %v454
        %v471 = vpack.c.bf16 %v457, %v456
        %v472 = vpack.c.bf16 %v459, %v458
        %v473 = vpack.c.bf16 %v461, %v460
        %v474 = vpack.c.bf16 %v463, %v462
        %v475 = vpack.c.bf16 %v465, %v464
        %v476 = vpack.c.bf16 %v467, %v466
        %v477 = vpack.c.bf16 %v469, %v468
        %478 = vset.pattern.permute.xlu0 1
        %479 = vperm.xlu0 %478, %v356
        %v480 = vpop.permute.xlu0 %479
        %481 = vset.pattern.permute.xlu0 1
        %482 = vperm.xlu0 %481, %v357
        %v483 = vpop.permute.xlu0 %482
        %484 = vset.pattern.permute.xlu0 1
        %485 = vperm.xlu0 %484, %v358
        %v486 = vpop.permute.xlu0 %485
        %487 = vset.pattern.permute.xlu0 1
        %488 = vperm.xlu0 %487, %v359
        %v489 = vpop.permute.xlu0 %488
        %490 = vset.pattern.permute.xlu0 1
        %491 = vperm.xlu0 %490, %v360
        %v492 = vpop.permute.xlu0 %491
        %493 = vset.pattern.permute.xlu0 1
        %494 = vperm.xlu0 %493, %v361
        %v495 = vpop.permute.xlu0 %494
        %496 = vset.pattern.permute.xlu0 1
        %497 = vperm.xlu0 %496, %v362
        %v498 = vpop.permute.xlu0 %497
        %499 = vset.pattern.permute.xlu0 1
        %500 = vperm.xlu0 %499, %v363
        %v501 = vpop.permute.xlu0 %500
        %502 = vset.pattern.permute.xlu0 1
        %503 = vperm.xlu0 %502, %v364
        %v504 = vpop.permute.xlu0 %503
        %505 = vset.pattern.permute.xlu0 1
        %506 = vperm.xlu0 %505, %v365
        %v507 = vpop.permute.xlu0 %506
        %508 = vset.pattern.permute.xlu0 1
        %509 = vperm.xlu0 %508, %v366
        %v510 = vpop.permute.xlu0 %509
        %511 = vset.pattern.permute.xlu0 1
        %512 = vperm.xlu0 %511, %v367
        %v513 = vpop.permute.xlu0 %512
        %514 = vset.pattern.permute.xlu0 1
        %515 = vperm.xlu0 %514, %v368
        %v516 = vpop.permute.xlu0 %515
        %517 = vset.pattern.permute.xlu0 1
        %518 = vperm.xlu0 %517, %v369
        %v519 = vpop.permute.xlu0 %518
        %520 = vset.pattern.permute.xlu0 1
        %521 = vperm.xlu0 %520, %v370
        %v522 = vpop.permute.xlu0 %521
        %523 = vset.pattern.permute.xlu0 1
        %524 = vperm.xlu0 %523, %v371
        %v525 = vpop.permute.xlu0 %524
        %vm526 = vcmp.eq.s32.totalorder %v373, %v480
        %vm527 = vcmp.eq.s32.totalorder %v373, %v483
        %vm528 = vcmp.eq.s32.totalorder %v373, %v486
        %vm529 = vcmp.eq.s32.totalorder %v373, %v489
        %vm530 = vcmp.eq.s32.totalorder %v373, %v492
        %vm531 = vcmp.eq.s32.totalorder %v373, %v495
        %vm532 = vcmp.eq.s32.totalorder %v373, %v498
        %vm533 = vcmp.eq.s32.totalorder %v373, %v501
        %vm534 = vcmp.eq.s32.totalorder %v373, %v504
        %vm535 = vcmp.eq.s32.totalorder %v373, %v507
        %vm536 = vcmp.eq.s32.totalorder %v373, %v510
        %vm537 = vcmp.eq.s32.totalorder %v373, %v513
        %vm538 = vcmp.eq.s32.totalorder %v373, %v516
        %vm539 = vcmp.eq.s32.totalorder %v373, %v519
        %vm540 = vcmp.eq.s32.totalorder %v373, %v522
        %vm541 = vcmp.eq.s32.totalorder %v373, %v525
        %v542 = vsel %vm526, 1, 0
        %v543 = vsel %vm527, 1, 0
        %v544 = vsel %vm528, 1, 0
        %v545 = vsel %vm529, 1, 0
        %v546 = vsel %vm530, 1, 0
        %v547 = vsel %vm531, 1, 0
        %v548 = vsel %vm532, 1, 0
        %v549 = vsel %vm533, 1, 0
        %v550 = vsel %vm534, 1, 0
        %v551 = vsel %vm535, 1, 0
        %v552 = vsel %vm536, 1, 0
        %v553 = vsel %vm537, 1, 0
        %v554 = vsel %vm538, 1, 0
        %v555 = vsel %vm539, 1, 0
        %v556 = vsel %vm540, 1, 0
        %v557 = vsel %vm541, 1, 0
        %v558 = vcvt.s32.f32 %v542
        %v559 = vcvt.s32.f32 %v543
        %v560 = vcvt.s32.f32 %v544
        %v561 = vcvt.s32.f32 %v545
        %v562 = vcvt.s32.f32 %v546
        %v563 = vcvt.s32.f32 %v547
        %v564 = vcvt.s32.f32 %v548
        %v565 = vcvt.s32.f32 %v549
        %v566 = vcvt.s32.f32 %v550
        %v567 = vcvt.s32.f32 %v551
        %v568 = vcvt.s32.f32 %v552
        %v569 = vcvt.s32.f32 %v553
        %v570 = vcvt.s32.f32 %v554
        %v571 = vcvt.s32.f32 %v555
        %v572 = vcvt.s32.f32 %v556
        %v573 = vcvt.s32.f32 %v557
        %v574 = vpack.c.bf16 %v559, %v558
        %v575 = vpack.c.bf16 %v561, %v560
        %v576 = vpack.c.bf16 %v563, %v562
        %v577 = vpack.c.bf16 %v565, %v564
        %v578 = vpack.c.bf16 %v567, %v566
        %v579 = vpack.c.bf16 %v569, %v568
        %v580 = vpack.c.bf16 %v571, %v570
        %v581 = vpack.c.bf16 %v573, %v572
        %v582 = vadd.bf16 %v470, %v574
        %v583 = vadd.bf16 %v471, %v575
        %v584 = vadd.bf16 %v472, %v576
        %v585 = vadd.bf16 %v473, %v577
        %v586 = vadd.bf16 %v474, %v578
        %v587 = vadd.bf16 %v475, %v579
        %v588 = vadd.bf16 %v476, %v580
        %v589 = vadd.bf16 %v477, %v581
        %590 = vset.pattern.permute.xlu0 2
        %591 = vperm.xlu0 %590, %v356
        %v592 = vpop.permute.xlu0 %591
        %593 = vset.pattern.permute.xlu0 2
        %594 = vperm.xlu0 %593, %v357
        %v595 = vpop.permute.xlu0 %594
        %596 = vset.pattern.permute.xlu0 2
        %597 = vperm.xlu0 %596, %v358
        %v598 = vpop.permute.xlu0 %597
        %599 = vset.pattern.permute.xlu0 2
        %600 = vperm.xlu0 %599, %v359
        %v601 = vpop.permute.xlu0 %600
        %602 = vset.pattern.permute.xlu0 2
        %603 = vperm.xlu0 %602, %v360
        %v604 = vpop.permute.xlu0 %603
        %605 = vset.pattern.permute.xlu0 2
        %606 = vperm.xlu0 %605, %v361
        %v607 = vpop.permute.xlu0 %606
        %608 = vset.pattern.permute.xlu0 2
        %609 = vperm.xlu0 %608, %v362
        %v610 = vpop.permute.xlu0 %609
        %611 = vset.pattern.permute.xlu0 2
        %612 = vperm.xlu0 %611, %v363
        %v613 = vpop.permute.xlu0 %612
        %614 = vset.pattern.permute.xlu0 2
        %615 = vperm.xlu0 %614, %v364
        %v616 = vpop.permute.xlu0 %615
        %617 = vset.pattern.permute.xlu0 2
        %618 = vperm.xlu0 %617, %v365
        %v619 = vpop.permute.xlu0 %618
        %620 = vset.pattern.permute.xlu0 2
        %621 = vperm.xlu0 %620, %v366
        %v622 = vpop.permute.xlu0 %621
        %623 = vset.pattern.permute.xlu0 2
        %624 = vperm.xlu0 %623, %v367
        %v625 = vpop.permute.xlu0 %624
        %626 = vset.pattern.permute.xlu0 2
        %627 = vperm.xlu0 %626, %v368
        %v628 = vpop.permute.xlu0 %627
        %629 = vset.pattern.permute.xlu0 2
        %630 = vperm.xlu0 %629, %v369
        %v631 = vpop.permute.xlu0 %630
        %632 = vset.pattern.permute.xlu0 2
        %633 = vperm.xlu0 %632, %v370
        %v634 = vpop.permute.xlu0 %633
        %635 = vset.pattern.permute.xlu0 2
        %636 = vperm.xlu0 %635, %v371
        %v637 = vpop.permute.xlu0 %636
        %vm638 = vcmp.eq.s32.totalorder %v373, %v592
        %vm639 = vcmp.eq.s32.totalorder %v373, %v595
        %vm640 = vcmp.eq.s32.totalorder %v373, %v598
        %vm641 = vcmp.eq.s32.totalorder %v373, %v601
        %vm642 = vcmp.eq.s32.totalorder %v373, %v604
        %vm643 = vcmp.eq.s32.totalorder %v373, %v607
        %vm644 = vcmp.eq.s32.totalorder %v373, %v610
        %vm645 = vcmp.eq.s32.totalorder %v373, %v613
        %vm646 = vcmp.eq.s32.totalorder %v373, %v616
        %vm647 = vcmp.eq.s32.totalorder %v373, %v619
        %vm648 = vcmp.eq.s32.totalorder %v373, %v622
        %vm649 = vcmp.eq.s32.totalorder %v373, %v625
        %vm650 = vcmp.eq.s32.totalorder %v373, %v628
        %vm651 = vcmp.eq.s32.totalorder %v373, %v631
        %vm652 = vcmp.eq.s32.totalorder %v373, %v634
        %vm653 = vcmp.eq.s32.totalorder %v373, %v637
        %v654 = vsel %vm638, 1, 0
        %v655 = vsel %vm639, 1, 0
        %v656 = vsel %vm640, 1, 0
        %v657 = vsel %vm641, 1, 0
        %v658 = vsel %vm642, 1, 0
        %v659 = vsel %vm643, 1, 0
        %v660 = vsel %vm644, 1, 0
        %v661 = vsel %vm645, 1, 0
        %v662 = vsel %vm646, 1, 0
        %v663 = vsel %vm647, 1, 0
        %v664 = vsel %vm648, 1, 0
        %v665 = vsel %vm649, 1, 0
        %v666 = vsel %vm650, 1, 0
        %v667 = vsel %vm651, 1, 0
        %v668 = vsel %vm652, 1, 0
        %v669 = vsel %vm653, 1, 0
        %v670 = vcvt.s32.f32 %v654
        %v671 = vcvt.s32.f32 %v655
        %v672 = vcvt.s32.f32 %v656
        %v673 = vcvt.s32.f32 %v657
        %v674 = vcvt.s32.f32 %v658
        %v675 = vcvt.s32.f32 %v659
        %v676 = vcvt.s32.f32 %v660
        %v677 = vcvt.s32.f32 %v661
        %v678 = vcvt.s32.f32 %v662
        %v679 = vcvt.s32.f32 %v663
        %v680 = vcvt.s32.f32 %v664
        %v681 = vcvt.s32.f32 %v665
        %v682 = vcvt.s32.f32 %v666
        %v683 = vcvt.s32.f32 %v667
        %v684 = vcvt.s32.f32 %v668
        %v685 = vcvt.s32.f32 %v669
        %v686 = vpack.c.bf16 %v671, %v670
        %v687 = vpack.c.bf16 %v673, %v672
        %v688 = vpack.c.bf16 %v675, %v674
        %v689 = vpack.c.bf16 %v677, %v676
        %v690 = vpack.c.bf16 %v679, %v678
        %v691 = vpack.c.bf16 %v681, %v680
        %v692 = vpack.c.bf16 %v683, %v682
        %v693 = vpack.c.bf16 %v685, %v684
        %v694 = vadd.bf16 %v582, %v686
        %v695 = vadd.bf16 %v583, %v687
        %v696 = vadd.bf16 %v584, %v688
        %v697 = vadd.bf16 %v585, %v689
        %v698 = vadd.bf16 %v586, %v690
        %v699 = vadd.bf16 %v587, %v691
        %v700 = vadd.bf16 %v588, %v692
        %v701 = vadd.bf16 %v589, %v693
        %702 = vset.pattern.permute.xlu0 3
        %703 = vperm.xlu0 %702, %v356
        %v704 = vpop.permute.xlu0 %703
        %705 = vset.pattern.permute.xlu0 3
        %706 = vperm.xlu0 %705, %v357
        %v707 = vpop.permute.xlu0 %706
        %708 = vset.pattern.permute.xlu0 3
        %709 = vperm.xlu0 %708, %v358
        %v710 = vpop.permute.xlu0 %709
        %711 = vset.pattern.permute.xlu0 3
        %712 = vperm.xlu0 %711, %v359
        %v713 = vpop.permute.xlu0 %712
        %714 = vset.pattern.permute.xlu0 3
        %715 = vperm.xlu0 %714, %v360
        %v716 = vpop.permute.xlu0 %715
        %717 = vset.pattern.permute.xlu0 3
        %718 = vperm.xlu0 %717, %v361
        %v719 = vpop.permute.xlu0 %718
        %720 = vset.pattern.permute.xlu0 3
        %721 = vperm.xlu0 %720, %v362
        %v722 = vpop.permute.xlu0 %721
        %723 = vset.pattern.permute.xlu0 3
        %724 = vperm.xlu0 %723, %v363
        %v725 = vpop.permute.xlu0 %724
        %726 = vset.pattern.permute.xlu0 3
        %727 = vperm.xlu0 %726, %v364
        %v728 = vpop.permute.xlu0 %727
        %729 = vset.pattern.permute.xlu0 3
        %730 = vperm.xlu0 %729, %v365
        %v731 = vpop.permute.xlu0 %730
        %732 = vset.pattern.permute.xlu0 3
        %733 = vperm.xlu0 %732, %v366
        %v734 = vpop.permute.xlu0 %733
        %735 = vset.pattern.permute.xlu0 3
        %736 = vperm.xlu0 %735, %v367
        %v737 = vpop.permute.xlu0 %736
        %738 = vset.pattern.permute.xlu0 3
        %739 = vperm.xlu0 %738, %v368
        %v740 = vpop.permute.xlu0 %739
        %741 = vset.pattern.permute.xlu0 3
        %742 = vperm.xlu0 %741, %v369
        %v743 = vpop.permute.xlu0 %742
        %744 = vset.pattern.permute.xlu0 3
        %745 = vperm.xlu0 %744, %v370
        %v746 = vpop.permute.xlu0 %745
        %747 = vset.pattern.permute.xlu0 3
        %748 = vperm.xlu0 %747, %v371
        %v749 = vpop.permute.xlu0 %748
        %vm750 = vcmp.eq.s32.totalorder %v373, %v704
        %vm751 = vcmp.eq.s32.totalorder %v373, %v707
        %vm752 = vcmp.eq.s32.totalorder %v373, %v710
        %vm753 = vcmp.eq.s32.totalorder %v373, %v713
        %vm754 = vcmp.eq.s32.totalorder %v373, %v716
        %vm755 = vcmp.eq.s32.totalorder %v373, %v719
        %vm756 = vcmp.eq.s32.totalorder %v373, %v722
        %vm757 = vcmp.eq.s32.totalorder %v373, %v725
        %vm758 = vcmp.eq.s32.totalorder %v373, %v728
        %vm759 = vcmp.eq.s32.totalorder %v373, %v731
        %vm760 = vcmp.eq.s32.totalorder %v373, %v734
        %vm761 = vcmp.eq.s32.totalorder %v373, %v737
        %vm762 = vcmp.eq.s32.totalorder %v373, %v740
        %vm763 = vcmp.eq.s32.totalorder %v373, %v743
        %vm764 = vcmp.eq.s32.totalorder %v373, %v746
        %vm765 = vcmp.eq.s32.totalorder %v373, %v749
        %v766 = vsel %vm750, 1, 0
        %v767 = vsel %vm751, 1, 0
        %v768 = vsel %vm752, 1, 0
        %v769 = vsel %vm753, 1, 0
        %v770 = vsel %vm754, 1, 0
        %v771 = vsel %vm755, 1, 0
        %v772 = vsel %vm756, 1, 0
        %v773 = vsel %vm757, 1, 0
        %v774 = vsel %vm758, 1, 0
        %v775 = vsel %vm759, 1, 0
        %v776 = vsel %vm760, 1, 0
        %v777 = vsel %vm761, 1, 0
        %v778 = vsel %vm762, 1, 0
        %v779 = vsel %vm763, 1, 0
        %v780 = vsel %vm764, 1, 0
        %v781 = vsel %vm765, 1, 0
        %v782 = vcvt.s32.f32 %v766
        %v783 = vcvt.s32.f32 %v767
        %v784 = vcvt.s32.f32 %v768
        %v785 = vcvt.s32.f32 %v769
        %v786 = vcvt.s32.f32 %v770
        %v787 = vcvt.s32.f32 %v771
        %v788 = vcvt.s32.f32 %v772
        %v789 = vcvt.s32.f32 %v773
        %v790 = vcvt.s32.f32 %v774
        %v791 = vcvt.s32.f32 %v775
        %v792 = vcvt.s32.f32 %v776
        %v793 = vcvt.s32.f32 %v777
        %v794 = vcvt.s32.f32 %v778
        %v795 = vcvt.s32.f32 %v779
        %v796 = vcvt.s32.f32 %v780
        %v797 = vcvt.s32.f32 %v781
        %v798 = vpack.c.bf16 %v783, %v782
        %v799 = vpack.c.bf16 %v785, %v784
        %v800 = vpack.c.bf16 %v787, %v786
        %v801 = vpack.c.bf16 %v789, %v788
        %v802 = vpack.c.bf16 %v791, %v790
        %v803 = vpack.c.bf16 %v793, %v792
        %v804 = vpack.c.bf16 %v795, %v794
        %v805 = vpack.c.bf16 %v797, %v796
        %v806 = vadd.bf16 %v694, %v798
        %v807 = vadd.bf16 %v695, %v799
        %v808 = vadd.bf16 %v696, %v800
        %v809 = vadd.bf16 %v697, %v801
        %v810 = vadd.bf16 %v698, %v802
        %v811 = vadd.bf16 %v699, %v803
        %v812 = vadd.bf16 %v700, %v804
        %v813 = vadd.bf16 %v701, %v805
        %v814 = vld [vmem:[%s2] sm:$0xf]
        %v815 = vld [vmem:[%s2 + $0x4] sm:$0xf]
        %v816 = vld [vmem:[%s2 + $0x8] sm:$0xf]
        %v817 = vld [vmem:[%s2 + $0xc] sm:$0xf]
        %v818 = vld [vmem:[%s2 + $0x10] sm:$0xf]
        %v819 = vld [vmem:[%s2 + $0x14] sm:$0xf]
        %v820 = vld [vmem:[%s2 + $0x18] sm:$0xf]
        %v821 = vld [vmem:[%s2 + $0x1c] sm:$0xf]
        %v822 = vlaneseq
        %v823 = vshrl.u32 %v822, 7
        %v824 = vsub.s32 0, %v823
        %v825 = vrot.slane %v355, %v824
        %v834 = vunpack.c.l.b16 %v814
        %v835 = vunpack.c.l.b16 %v815
        %v836 = vunpack.c.l.b16 %v816
        %v837 = vunpack.c.l.b16 %v817
        %v838 = vunpack.c.l.b16 %v818
        %v839 = vunpack.c.l.b16 %v819
        %v840 = vunpack.c.l.b16 %v820
        %v841 = vunpack.c.l.b16 %v821
        %v842 = vpack.c.b16 %v835, %v834
        %v843 = vpack.c.b16 %v837, %v836
        %v844 = vpack.c.b16 %v839, %v838
        %v845 = vpack.c.b16 %v841, %v840
        %vm850 = vcmask 523264
        %v852 = vsel %vm850, %v806, 0
        %v855 = vsel %vm850, %v807, 0
        %v858 = vsel %vm850, %v808, 0
        %v861 = vsel %vm850, %v809, 0
        %v864 = vsel %vm850, %v810, 0
        %v867 = vsel %vm850, %v811, 0
        %v870 = vsel %vm850, %v812, 0
        %v873 = vsel %vm850, %v813, 0
        %875 = vmatprep.subr.bf16.mxu0 0
        %876 = vmatpush1.bf16.msra.mxu0 0
        %877 = vmatprep.subr.bf16.mxu0 0
        %878 = vmatpush1.bf16.msra.mxu0 0
        %879 = vmatprep.subr.bf16.mxu0 0
        %880 = vmatpush1.bf16.msra.mxu0 0
        %881 = vmatprep.subr.bf16.mxu0 0
        %882 = vmatpush1.bf16.msra.mxu0 0
        %883 = vmatprep.subr.bf16.mxu0 0
        %884 = vmatpush1.bf16.msra.mxu0 %v845
        %885 = vmatprep.subr.bf16.mxu0 0
        %886 = vmatpush1.bf16.msra.mxu0 %v844
        %887 = vmatprep.subr.bf16.mxu0 0
        %888 = vmatpush1.bf16.msra.mxu0 %v843
        %889 = vmatprep.subr.bf16.mxu0 0
        %890 = vmatpush1.bf16.msra.mxu0 %v842
        %891 = vmatprep.subr.bf16.mxu0 0
        %892 = vmatpush2.bf16.msra.mxu0 0
        %893 = vmatprep.subr.bf16.mxu0 0
        %894 = vmatpush2.bf16.msra.mxu0 0
        %895 = vmatprep.subr.bf16.mxu0 0
        %896 = vmatpush2.bf16.msra.mxu0 0
        %897 = vmatprep.subr.bf16.mxu0 0
        %898 = vmatpush2.bf16.msra.mxu0 0
        %899 = vmatprep.subr.bf16.mxu0 0
        %900 = vmatpush2.bf16.msra.mxu0 0
        %901 = vmatprep.subr.bf16.mxu0 0
        %902 = vmatpush2.bf16.msra.mxu0 0
        %903 = vmatprep.subr.bf16.mxu0 0
        %904 = vmatpush2.bf16.msra.mxu0 0
        %905 = vmatprep.subr.bf16.mxu0 0
        %906 = vmatpush2.bf16.msra.mxu0 0
        %907 = vmatprep.mubr.bf16.mxu0 0
        %908 = vmatmul.mubr.bf16.gmra.mxu0 %v852
        %v909 = vpop.f32.mrf.mxu0
        %v910 = vadd.f32 %v825, %v909
        %v911 = vpop.f32.mrf.mxu0
        %v912 = vpop.f32.mrf.mxu0
        %v913 = vadd.f32 %v825, %v912
        %v914 = vpop.f32.mrf.mxu0
        %915 = vmatprep.mubr.bf16.mxu0 0
        %916 = vmatmul.mubr.bf16.gmra.mxu0 %v855
        %v917 = vpop.f32.mrf.mxu0
        %v918 = vadd.f32 %v825, %v917
        %v919 = vpop.f32.mrf.mxu0
        %v920 = vpop.f32.mrf.mxu0
        %v921 = vadd.f32 %v825, %v920
        %v922 = vpop.f32.mrf.mxu0
        %923 = vmatprep.mubr.bf16.mxu0 0
        %924 = vmatmul.mubr.bf16.gmra.mxu0 %v858
        %v925 = vpop.f32.mrf.mxu0
        %v926 = vadd.f32 %v825, %v925
        %v927 = vpop.f32.mrf.mxu0
        %v928 = vpop.f32.mrf.mxu0
        %v929 = vadd.f32 %v825, %v928
        %v930 = vpop.f32.mrf.mxu0
        %931 = vmatprep.mubr.bf16.mxu0 0
        %932 = vmatmul.mubr.bf16.gmra.mxu0 %v861
        %v933 = vpop.f32.mrf.mxu0
        %v934 = vadd.f32 %v825, %v933
        %v935 = vpop.f32.mrf.mxu0
        %v936 = vpop.f32.mrf.mxu0
        %v937 = vadd.f32 %v825, %v936
        %v938 = vpop.f32.mrf.mxu0
        %939 = vmatprep.mubr.bf16.mxu0 0
        %940 = vmatmul.mubr.bf16.gmra.mxu0 %v864
        %v941 = vpop.f32.mrf.mxu0
        %v942 = vadd.f32 %v825, %v941
        %v943 = vpop.f32.mrf.mxu0
        %v944 = vpop.f32.mrf.mxu0
        %v945 = vadd.f32 %v825, %v944
        %v946 = vpop.f32.mrf.mxu0
        %947 = vmatprep.mubr.bf16.mxu0 0
        %948 = vmatmul.mubr.bf16.gmra.mxu0 %v867
        %v949 = vpop.f32.mrf.mxu0
        %v950 = vadd.f32 %v825, %v949
        %v951 = vpop.f32.mrf.mxu0
        %v952 = vpop.f32.mrf.mxu0
        %v953 = vadd.f32 %v825, %v952
        %v954 = vpop.f32.mrf.mxu0
        %955 = vmatprep.mubr.bf16.mxu0 0
        %956 = vmatmul.mubr.bf16.gmra.mxu0 %v870
        %v957 = vpop.f32.mrf.mxu0
        %v958 = vadd.f32 %v825, %v957
        %v959 = vpop.f32.mrf.mxu0
        %v960 = vpop.f32.mrf.mxu0
        %v961 = vadd.f32 %v825, %v960
        %v962 = vpop.f32.mrf.mxu0
        %963 = vmatprep.mubr.bf16.mxu0 0
        %964 = vmatmul.mubr.bf16.gmra.mxu0 %v873
        %v965 = vpop.f32.mrf.mxu0
        %v966 = vadd.f32 %v825, %v965
        %v967 = vpop.f32.mrf.mxu0
        %v968 = vpop.f32.mrf.mxu0
        %v969 = vadd.f32 %v825, %v968
        %v970 = vpop.f32.mrf.mxu0
        %971 = vdwg.mxu0
        %v972 = vsel %vm850, %v910, 0.0
        %973 = vadd.xlane.f32.xlu0 %v972
        %v974 = vpop.xlane.xlu0 %973
        %v975 = vsel %vm850, %v913, 0.0
        %976 = vadd.xlane.f32.xlu0 %v975
        %v977 = vpop.xlane.xlu0 %976
        %v978 = vsel %vm850, %v918, 0.0
        %979 = vadd.xlane.f32.xlu0 %v978
        %v980 = vpop.xlane.xlu0 %979
        %v981 = vsel %vm850, %v921, 0.0
        %982 = vadd.xlane.f32.xlu0 %v981
        %v983 = vpop.xlane.xlu0 %982
        %v984 = vsel %vm850, %v926, 0.0
        %985 = vadd.xlane.f32.xlu0 %v984
        %v986 = vpop.xlane.xlu0 %985
        %v987 = vsel %vm850, %v929, 0.0
        %988 = vadd.xlane.f32.xlu0 %v987
        %v989 = vpop.xlane.xlu0 %988
        %v990 = vsel %vm850, %v934, 0.0
        %991 = vadd.xlane.f32.xlu0 %v990
        %v992 = vpop.xlane.xlu0 %991
        %v993 = vsel %vm850, %v937, 0.0
        %994 = vadd.xlane.f32.xlu0 %v993
        %v995 = vpop.xlane.xlu0 %994
        %v996 = vsel %vm850, %v942, 0.0
        %997 = vadd.xlane.f32.xlu0 %v996
        %v998 = vpop.xlane.xlu0 %997
        %v999 = vsel %vm850, %v945, 0.0
        %1000 = vadd.xlane.f32.xlu0 %v999
        %v1001 = vpop.xlane.xlu0 %1000
        %v1002 = vsel %vm850, %v950, 0.0
        %1003 = vadd.xlane.f32.xlu0 %v1002
        %v1004 = vpop.xlane.xlu0 %1003
        %v1005 = vsel %vm850, %v953, 0.0
        %1006 = vadd.xlane.f32.xlu0 %v1005
        %v1007 = vpop.xlane.xlu0 %1006
        %v1008 = vsel %vm850, %v958, 0.0
        %1009 = vadd.xlane.f32.xlu0 %v1008
        %v1010 = vpop.xlane.xlu0 %1009
        %v1011 = vsel %vm850, %v961, 0.0
        %1012 = vadd.xlane.f32.xlu0 %v1011
        %v1013 = vpop.xlane.xlu0 %1012
        %v1014 = vsel %vm850, %v966, 0.0
        %1015 = vadd.xlane.f32.xlu0 %v1014
        %v1016 = vpop.xlane.xlu0 %1015
        %v1017 = vsel %vm850, %v969, 0.0
        %1018 = vadd.xlane.f32.xlu0 %v1017
        %v1019 = vpop.xlane.xlu0 %1018
        %v1020 = vrcp.pop 64.0
        %v1021 = vmul.f32 %v974, %v1020
        %v1022 = vmul.f32 %v977, %v1020
        %v1023 = vmul.f32 %v980, %v1020
        %v1024 = vmul.f32 %v983, %v1020
        %v1025 = vmul.f32 %v986, %v1020
        %v1026 = vmul.f32 %v989, %v1020
        %v1027 = vmul.f32 %v992, %v1020
        %v1028 = vmul.f32 %v995, %v1020
        %v1029 = vmul.f32 %v998, %v1020
        %v1030 = vmul.f32 %v1001, %v1020
        %v1031 = vmul.f32 %v1004, %v1020
        %v1032 = vmul.f32 %v1007, %v1020
        %v1033 = vmul.f32 %v1010, %v1020
        %v1034 = vmul.f32 %v1013, %v1020
        %v1035 = vmul.f32 %v1016, %v1020
        %v1036 = vmul.f32 %v1019, %v1020
        %v1037 = vmul.f32 %v910, %v910
        %v1038 = vmul.f32 %v913, %v913
        %v1039 = vmul.f32 %v918, %v918
        %v1040 = vmul.f32 %v921, %v921
        %v1041 = vmul.f32 %v926, %v926
        %v1042 = vmul.f32 %v929, %v929
        %v1043 = vmul.f32 %v934, %v934
        %v1044 = vmul.f32 %v937, %v937
        %v1045 = vmul.f32 %v942, %v942
        %v1046 = vmul.f32 %v945, %v945
        %v1047 = vmul.f32 %v950, %v950
        %v1048 = vmul.f32 %v953, %v953
        %v1049 = vmul.f32 %v958, %v958
        %v1050 = vmul.f32 %v961, %v961
        %v1051 = vmul.f32 %v966, %v966
        %v1052 = vmul.f32 %v969, %v969
        %v1053 = vsel %vm850, %v1037, 0.0
        %1054 = vadd.xlane.f32.xlu0 %v1053
        %v1055 = vpop.xlane.xlu0 %1054
        %v1056 = vsel %vm850, %v1038, 0.0
        %1057 = vadd.xlane.f32.xlu0 %v1056
        %v1058 = vpop.xlane.xlu0 %1057
        %v1059 = vsel %vm850, %v1039, 0.0
        %1060 = vadd.xlane.f32.xlu0 %v1059
        %v1061 = vpop.xlane.xlu0 %1060
        %v1062 = vsel %vm850, %v1040, 0.0
        %1063 = vadd.xlane.f32.xlu0 %v1062
        %v1064 = vpop.xlane.xlu0 %1063
        %v1065 = vsel %vm850, %v1041, 0.0
        %1066 = vadd.xlane.f32.xlu0 %v1065
        %v1067 = vpop.xlane.xlu0 %1066
        %v1068 = vsel %vm850, %v1042, 0.0
        %1069 = vadd.xlane.f32.xlu0 %v1068
        %v1070 = vpop.xlane.xlu0 %1069
        %v1071 = vsel %vm850, %v1043, 0.0
        %1072 = vadd.xlane.f32.xlu0 %v1071
        %v1073 = vpop.xlane.xlu0 %1072
        %v1074 = vsel %vm850, %v1044, 0.0
        %1075 = vadd.xlane.f32.xlu0 %v1074
        %v1076 = vpop.xlane.xlu0 %1075
        %v1077 = vsel %vm850, %v1045, 0.0
        %1078 = vadd.xlane.f32.xlu0 %v1077
        %v1079 = vpop.xlane.xlu0 %1078
        %v1080 = vsel %vm850, %v1046, 0.0
        %1081 = vadd.xlane.f32.xlu0 %v1080
        %v1082 = vpop.xlane.xlu0 %1081
        %v1083 = vsel %vm850, %v1047, 0.0
        %1084 = vadd.xlane.f32.xlu0 %v1083
        %v1085 = vpop.xlane.xlu0 %1084
        %v1086 = vsel %vm850, %v1048, 0.0
        %1087 = vadd.xlane.f32.xlu0 %v1086
        %v1088 = vpop.xlane.xlu0 %1087
        %v1089 = vsel %vm850, %v1049, 0.0
        %1090 = vadd.xlane.f32.xlu0 %v1089
        %v1091 = vpop.xlane.xlu0 %1090
        %v1092 = vsel %vm850, %v1050, 0.0
        %1093 = vadd.xlane.f32.xlu0 %v1092
        %v1094 = vpop.xlane.xlu0 %1093
        %v1095 = vsel %vm850, %v1051, 0.0
        %1096 = vadd.xlane.f32.xlu0 %v1095
        %v1097 = vpop.xlane.xlu0 %1096
        %v1098 = vsel %vm850, %v1052, 0.0
        %1099 = vadd.xlane.f32.xlu0 %v1098
        %v1100 = vpop.xlane.xlu0 %1099
        %v1101 = vmul.f32 %v1055, %v1020
        %v1102 = vmul.f32 %v1058, %v1020
        %v1103 = vmul.f32 %v1061, %v1020
        %v1104 = vmul.f32 %v1064, %v1020
        %v1105 = vmul.f32 %v1067, %v1020
        %v1106 = vmul.f32 %v1070, %v1020
        %v1107 = vmul.f32 %v1073, %v1020
        %v1108 = vmul.f32 %v1076, %v1020
        %v1109 = vmul.f32 %v1079, %v1020
        %v1110 = vmul.f32 %v1082, %v1020
        %v1111 = vmul.f32 %v1085, %v1020
        %v1112 = vmul.f32 %v1088, %v1020
        %v1113 = vmul.f32 %v1091, %v1020
        %v1114 = vmul.f32 %v1094, %v1020
        %v1115 = vmul.f32 %v1097, %v1020
        %v1116 = vmul.f32 %v1100, %v1020
        %v1117 = vsub.f32 %v910, %v1021
        %v1118 = vsub.f32 %v913, %v1022
        %v1119 = vsub.f32 %v918, %v1023
        %v1120 = vsub.f32 %v921, %v1024
        %v1121 = vsub.f32 %v926, %v1025
        %v1122 = vsub.f32 %v929, %v1026
        %v1123 = vsub.f32 %v934, %v1027
        %v1124 = vsub.f32 %v937, %v1028
        %v1125 = vsub.f32 %v942, %v1029
        %v1126 = vsub.f32 %v945, %v1030
        %v1127 = vsub.f32 %v950, %v1031
        %v1128 = vsub.f32 %v953, %v1032
        %v1129 = vsub.f32 %v958, %v1033
        %v1130 = vsub.f32 %v961, %v1034
        %v1131 = vsub.f32 %v966, %v1035
        %v1132 = vsub.f32 %v969, %v1036
        %v1133 = vmul.f32 %v1021, %v1021
        %v1134 = vmul.f32 %v1022, %v1022
        %v1135 = vmul.f32 %v1023, %v1023
        %v1136 = vmul.f32 %v1024, %v1024
        %v1137 = vmul.f32 %v1025, %v1025
        %v1138 = vmul.f32 %v1026, %v1026
        %v1139 = vmul.f32 %v1027, %v1027
        %v1140 = vmul.f32 %v1028, %v1028
        %v1141 = vmul.f32 %v1029, %v1029
        %v1142 = vmul.f32 %v1030, %v1030
        %v1143 = vmul.f32 %v1031, %v1031
        %v1144 = vmul.f32 %v1032, %v1032
        %v1145 = vmul.f32 %v1033, %v1033
        %v1146 = vmul.f32 %v1034, %v1034
        %v1147 = vmul.f32 %v1035, %v1035
        %v1148 = vmul.f32 %v1036, %v1036
        %v1149 = vsub.f32 %v1101, %v1133
        %v1150 = vsub.f32 %v1102, %v1134
        %v1151 = vsub.f32 %v1103, %v1135
        %v1152 = vsub.f32 %v1104, %v1136
        %v1153 = vsub.f32 %v1105, %v1137
        %v1154 = vsub.f32 %v1106, %v1138
        %v1155 = vsub.f32 %v1107, %v1139
        %v1156 = vsub.f32 %v1108, %v1140
        %v1157 = vsub.f32 %v1109, %v1141
        %v1158 = vsub.f32 %v1110, %v1142
        %v1159 = vsub.f32 %v1111, %v1143
        %v1160 = vsub.f32 %v1112, %v1144
        %v1161 = vsub.f32 %v1113, %v1145
        %v1162 = vsub.f32 %v1114, %v1146
        %v1163 = vsub.f32 %v1115, %v1147
        %v1164 = vsub.f32 %v1116, %v1148
        %v1165 = vadd.f32 %v1149, 1e-05
        %v1166 = vadd.f32 %v1150, 1e-05
        %v1167 = vadd.f32 %v1151, 1e-05
        %v1168 = vadd.f32 %v1152, 1e-05
        %v1169 = vadd.f32 %v1153, 1e-05
        %v1170 = vadd.f32 %v1154, 1e-05
        %v1171 = vadd.f32 %v1155, 1e-05
        %v1172 = vadd.f32 %v1156, 1e-05
        %v1173 = vadd.f32 %v1157, 1e-05
        %v1174 = vadd.f32 %v1158, 1e-05
        %v1175 = vadd.f32 %v1159, 1e-05
        %v1176 = vadd.f32 %v1160, 1e-05
        %v1177 = vadd.f32 %v1161, 1e-05
        %v1178 = vadd.f32 %v1162, 1e-05
        %v1179 = vadd.f32 %v1163, 1e-05
        %v1180 = vadd.f32 %v1164, 1e-05
        %v1181 = vrsqrt.pop %v1165
        %v1182 = vrsqrt.pop %v1166
        %v1183 = vrsqrt.pop %v1167
        %v1184 = vrsqrt.pop %v1168
        %v1185 = vrsqrt.pop %v1169
        %v1186 = vrsqrt.pop %v1170
        %v1187 = vrsqrt.pop %v1171
        %v1188 = vrsqrt.pop %v1172
        %v1189 = vrsqrt.pop %v1173
        %v1190 = vrsqrt.pop %v1174
        %v1191 = vrsqrt.pop %v1175
        %v1192 = vrsqrt.pop %v1176
        %v1193 = vrsqrt.pop %v1177
        %v1194 = vrsqrt.pop %v1178
        %v1195 = vrsqrt.pop %v1179
        %v1196 = vrsqrt.pop %v1180
        %v1197 = vmul.f32 %v1117, %v1181
        %v1198 = vmul.f32 %v1118, %v1182
        %v1199 = vmul.f32 %v1119, %v1183
        %v1200 = vmul.f32 %v1120, %v1184
        %v1201 = vmul.f32 %v1121, %v1185
        %v1202 = vmul.f32 %v1122, %v1186
        %v1203 = vmul.f32 %v1123, %v1187
        %v1204 = vmul.f32 %v1124, %v1188
        %v1205 = vmul.f32 %v1125, %v1189
        %v1206 = vmul.f32 %v1126, %v1190
        %v1207 = vmul.f32 %v1127, %v1191
        %v1208 = vmul.f32 %v1128, %v1192
        %v1209 = vmul.f32 %v1129, %v1193
        %v1210 = vmul.f32 %v1130, %v1194
        %v1211 = vmul.f32 %v1131, %v1195
        %v1212 = vmul.f32 %v1132, %v1196
        %v1213 = vpack.c.bf16 %v1198, %v1197
        %v1214 = vpack.c.bf16 %v1200, %v1199
        %v1215 = vpack.c.bf16 %v1202, %v1201
        %v1216 = vpack.c.bf16 %v1204, %v1203
        %v1217 = vpack.c.bf16 %v1206, %v1205
        %v1218 = vpack.c.bf16 %v1208, %v1207
        %v1219 = vpack.c.bf16 %v1210, %v1209
        %v1220 = vpack.c.bf16 %v1212, %v1211
        %v1221 = vld [vmem:[%s3] sm:$0xf]
        %v1222 = vld [vmem:[%s3 + $0x4] sm:$0xf]
        %v1223 = vld [vmem:[%s3 + $0x8] sm:$0xf]
        %v1224 = vld [vmem:[%s3 + $0xc] sm:$0xf]
        %v1225 = vld [vmem:[%s3 + $0x10] sm:$0xf]
        %v1226 = vld [vmem:[%s3 + $0x14] sm:$0xf]
        %v1227 = vld [vmem:[%s3 + $0x18] sm:$0xf]
        %v1228 = vld [vmem:[%s3 + $0x1c] sm:$0xf]
        %v1229 = vld [vmem:[%s352] sm:$0xff]
        %v1230 = vld [vmem:[%s352 + $0x8] sm:$0xff]
        %v1231 = vld [vmem:[%s352 + $0x10] sm:$0xff]
        %v1232 = vld [vmem:[%s352 + $0x18] sm:$0xff]
        %v1233 = vld [vmem:[%s352 + $0x20] sm:$0xff]
        %v1234 = vld [vmem:[%s352 + $0x28] sm:$0xff]
        %v1235 = vld [vmem:[%s352 + $0x30] sm:$0xff]
        %v1236 = vld [vmem:[%s352 + $0x38] sm:$0xff]
        %v1237 = vld [vmem:[%s352 + $0x40] sm:$0xff]
        %v1238 = vld [vmem:[%s352 + $0x48] sm:$0xff]
        %v1239 = vld [vmem:[%s352 + $0x50] sm:$0xff]
        %v1240 = vld [vmem:[%s352 + $0x58] sm:$0xff]
        %v1241 = vld [vmem:[%s352 + $0x60] sm:$0xff]
        %v1242 = vld [vmem:[%s352 + $0x68] sm:$0xff]
        %v1243 = vld [vmem:[%s352 + $0x70] sm:$0xff]
        %v1244 = vld [vmem:[%s352 + $0x78] sm:$0xff]
        %v1245 = vpack.c.bf16 %v1230, %v1229
        %v1246 = vpack.c.bf16 %v1232, %v1231
        %v1247 = vpack.c.bf16 %v1234, %v1233
        %v1248 = vpack.c.bf16 %v1236, %v1235
        %v1249 = vpack.c.bf16 %v1238, %v1237
        %v1250 = vpack.c.bf16 %v1240, %v1239
        %v1251 = vpack.c.bf16 %v1242, %v1241
        %v1252 = vpack.c.bf16 %v1244, %v1243
        %v1253 = vld [vmem:[%s4] sm:$0xf]
        %v1254 = vld [vmem:[%s4 + $0x4] sm:$0xf]
        %v1257 = vunpack.c.l.b16 %v1253
        %v1258 = vunpack.c.l.b16 %v1254
        %v1259 = vpack.c.b16 %v1258, %v1257
        %vm1261 = vcmask 130048
        %v1263 = vsel %vm1261, %v1245, 0
        %v1266 = vsel %vm1261, %v1246, 0
        %v1269 = vsel %vm1261, %v1247, 0
        %v1272 = vsel %vm1261, %v1248, 0
        %v1275 = vsel %vm1261, %v1249, 0
        %v1278 = vsel %vm1261, %v1250, 0
        %v1281 = vsel %vm1261, %v1251, 0
        %v1284 = vsel %vm1261, %v1252, 0
        %1286 = vmatprep.subr.bf16.mxu0 0
        %1287 = vmatpush1.bf16.msra.mxu0 0
        %1288 = vmatprep.subr.bf16.mxu0 0
        %1289 = vmatpush1.bf16.msra.mxu0 0
        %1290 = vmatprep.subr.bf16.mxu0 0
        %1291 = vmatpush1.bf16.msra.mxu0 0
        %1292 = vmatprep.subr.bf16.mxu0 0
        %1293 = vmatpush1.bf16.msra.mxu0 0
        %1294 = vmatprep.subr.bf16.mxu0 0
        %1295 = vmatpush1.bf16.msra.mxu0 0
        %1296 = vmatprep.subr.bf16.mxu0 0
        %1297 = vmatpush1.bf16.msra.mxu0 0
        %1298 = vmatprep.subr.bf16.mxu0 0
        %1299 = vmatpush1.bf16.msra.mxu0 0
        %1300 = vmatprep.subr.bf16.mxu0 0
        %1301 = vmatpush1.bf16.msra.mxu0 %v1259
        %1302 = vmatprep.subr.bf16.mxu0 0
        %1303 = vmatpush2.bf16.msra.mxu0 0
        %1304 = vmatprep.subr.bf16.mxu0 0
        %1305 = vmatpush2.bf16.msra.mxu0 0
        %1306 = vmatprep.subr.bf16.mxu0 0
        %1307 = vmatpush2.bf16.msra.mxu0 0
        %1308 = vmatprep.subr.bf16.mxu0 0
        %1309 = vmatpush2.bf16.msra.mxu0 0
        %1310 = vmatprep.subr.bf16.mxu0 0
        %1311 = vmatpush2.bf16.msra.mxu0 0
        %1312 = vmatprep.subr.bf16.mxu0 0
        %1313 = vmatpush2.bf16.msra.mxu0 0
        %1314 = vmatprep.subr.bf16.mxu0 0
        %1315 = vmatpush2.bf16.msra.mxu0 0
        %1316 = vmatprep.subr.bf16.mxu0 0
        %1317 = vmatpush2.bf16.msra.mxu0 0
        %1318 = vmatprep.mubr.bf16.mxu0 0
        %1319 = vmatmul.mubr.bf16.gmra.mxu0 %v1263
        %v1320 = vpop.f32.mrf.mxu0
        %v1321 = vadd.f32 0.0, %v1320
        %v1322 = vpop.f32.mrf.mxu0
        %v1323 = vpop.f32.mrf.mxu0
        %v1324 = vadd.f32 0.0, %v1323
        %v1325 = vpop.f32.mrf.mxu0
        %1326 = vmatprep.mubr.bf16.mxu0 0
        %1327 = vmatmul.mubr.bf16.gmra.mxu0 %v1266
        %v1328 = vpop.f32.mrf.mxu0
        %v1329 = vadd.f32 0.0, %v1328
        %v1330 = vpop.f32.mrf.mxu0
        %v1331 = vpop.f32.mrf.mxu0
        %v1332 = vadd.f32 0.0, %v1331
        %v1333 = vpop.f32.mrf.mxu0
        %1334 = vmatprep.mubr.bf16.mxu0 0
        %1335 = vmatmul.mubr.bf16.gmra.mxu0 %v1269
        %v1336 = vpop.f32.mrf.mxu0
        %v1337 = vadd.f32 0.0, %v1336
        %v1338 = vpop.f32.mrf.mxu0
        %v1339 = vpop.f32.mrf.mxu0
        %v1340 = vadd.f32 0.0, %v1339
        %v1341 = vpop.f32.mrf.mxu0
        %1342 = vmatprep.mubr.bf16.mxu0 0
        %1343 = vmatmul.mubr.bf16.gmra.mxu0 %v1272
        %v1344 = vpop.f32.mrf.mxu0
        %v1345 = vadd.f32 0.0, %v1344
        %v1346 = vpop.f32.mrf.mxu0
        %v1347 = vpop.f32.mrf.mxu0
        %v1348 = vadd.f32 0.0, %v1347
        %v1349 = vpop.f32.mrf.mxu0
        %1350 = vmatprep.mubr.bf16.mxu0 0
        %1351 = vmatmul.mubr.bf16.gmra.mxu0 %v1275
        %v1352 = vpop.f32.mrf.mxu0
        %v1353 = vadd.f32 0.0, %v1352
        %v1354 = vpop.f32.mrf.mxu0
        %v1355 = vpop.f32.mrf.mxu0
        %v1356 = vadd.f32 0.0, %v1355
        %v1357 = vpop.f32.mrf.mxu0
        %1358 = vmatprep.mubr.bf16.mxu0 0
        %1359 = vmatmul.mubr.bf16.gmra.mxu0 %v1278
        %v1360 = vpop.f32.mrf.mxu0
        %v1361 = vadd.f32 0.0, %v1360
        %v1362 = vpop.f32.mrf.mxu0
        %v1363 = vpop.f32.mrf.mxu0
        %v1364 = vadd.f32 0.0, %v1363
        %v1365 = vpop.f32.mrf.mxu0
        %1366 = vmatprep.mubr.bf16.mxu0 0
        %1367 = vmatmul.mubr.bf16.gmra.mxu0 %v1281
        %v1368 = vpop.f32.mrf.mxu0
        %v1369 = vadd.f32 0.0, %v1368
        %v1370 = vpop.f32.mrf.mxu0
        %v1371 = vpop.f32.mrf.mxu0
        %v1372 = vadd.f32 0.0, %v1371
        %v1373 = vpop.f32.mrf.mxu0
        %1374 = vmatprep.mubr.bf16.mxu0 0
        %1375 = vmatmul.mubr.bf16.gmra.mxu0 %v1284
        %v1376 = vpop.f32.mrf.mxu0
        %v1377 = vadd.f32 0.0, %v1376
        %v1378 = vpop.f32.mrf.mxu0
        %v1379 = vpop.f32.mrf.mxu0
        %v1380 = vadd.f32 0.0, %v1379
        %v1381 = vpop.f32.mrf.mxu0
        %1382 = vdwg.mxu0
        %v1391 = vunpack.c.l.b16 %v1221
        %v1392 = vunpack.c.l.b16 %v1222
        %v1393 = vunpack.c.l.b16 %v1223
        %v1394 = vunpack.c.l.b16 %v1224
        %v1395 = vunpack.c.l.b16 %v1225
        %v1396 = vunpack.c.l.b16 %v1226
        %v1397 = vunpack.c.l.b16 %v1227
        %v1398 = vunpack.c.l.b16 %v1228
        %v1399 = vpack.c.b16 %v1392, %v1391
        %v1400 = vpack.c.b16 %v1394, %v1393
        %v1401 = vpack.c.b16 %v1396, %v1395
        %v1402 = vpack.c.b16 %v1398, %v1397
        %v1408 = vsel %vm850, %v1213, 0
        %v1411 = vsel %vm850, %v1214, 0
        %v1414 = vsel %vm850, %v1215, 0
        %v1417 = vsel %vm850, %v1216, 0
        %v1420 = vsel %vm850, %v1217, 0
        %v1423 = vsel %vm850, %v1218, 0
        %v1426 = vsel %vm850, %v1219, 0
        %v1429 = vsel %vm850, %v1220, 0
        %1431 = vmatprep.subr.bf16.mxu0 0
        %1432 = vmatpush1.bf16.msra.mxu0 0
        %1433 = vmatprep.subr.bf16.mxu0 0
        %1434 = vmatpush1.bf16.msra.mxu0 0
        %1435 = vmatprep.subr.bf16.mxu0 0
        %1436 = vmatpush1.bf16.msra.mxu0 0
        %1437 = vmatprep.subr.bf16.mxu0 0
        %1438 = vmatpush1.bf16.msra.mxu0 0
        %1439 = vmatprep.subr.bf16.mxu0 0
        %1440 = vmatpush1.bf16.msra.mxu0 %v1402
        %1441 = vmatprep.subr.bf16.mxu0 0
        %1442 = vmatpush1.bf16.msra.mxu0 %v1401
        %1443 = vmatprep.subr.bf16.mxu0 0
        %1444 = vmatpush1.bf16.msra.mxu0 %v1400
        %1445 = vmatprep.subr.bf16.mxu0 0
        %1446 = vmatpush1.bf16.msra.mxu0 %v1399
        %1447 = vmatprep.subr.bf16.mxu0 0
        %1448 = vmatpush2.bf16.msra.mxu0 0
        %1449 = vmatprep.subr.bf16.mxu0 0
        %1450 = vmatpush2.bf16.msra.mxu0 0
        %1451 = vmatprep.subr.bf16.mxu0 0
        %1452 = vmatpush2.bf16.msra.mxu0 0
        %1453 = vmatprep.subr.bf16.mxu0 0
        %1454 = vmatpush2.bf16.msra.mxu0 0
        %1455 = vmatprep.subr.bf16.mxu0 0
        %1456 = vmatpush2.bf16.msra.mxu0 0
        %1457 = vmatprep.subr.bf16.mxu0 0
        %1458 = vmatpush2.bf16.msra.mxu0 0
        %1459 = vmatprep.subr.bf16.mxu0 0
        %1460 = vmatpush2.bf16.msra.mxu0 0
        %1461 = vmatprep.subr.bf16.mxu0 0
        %1462 = vmatpush2.bf16.msra.mxu0 0
        %1463 = vmatprep.mubr.bf16.mxu0 0
        %1464 = vmatmul.mubr.bf16.gmra.mxu0 %v1408
        %v1465 = vpop.f32.mrf.mxu0
        %v1466 = vadd.f32 %v1321, %v1465
        %v1467 = vpop.f32.mrf.mxu0
        %v1468 = vpop.f32.mrf.mxu0
        %v1469 = vadd.f32 %v1324, %v1468
        %v1470 = vpop.f32.mrf.mxu0
        %1471 = vmatprep.mubr.bf16.mxu0 0
        %1472 = vmatmul.mubr.bf16.gmra.mxu0 %v1411
        %v1473 = vpop.f32.mrf.mxu0
        %v1474 = vadd.f32 %v1329, %v1473
        %v1475 = vpop.f32.mrf.mxu0
        %v1476 = vpop.f32.mrf.mxu0
        %v1477 = vadd.f32 %v1332, %v1476
        %v1478 = vpop.f32.mrf.mxu0
        %1479 = vmatprep.mubr.bf16.mxu0 0
        %1480 = vmatmul.mubr.bf16.gmra.mxu0 %v1414
        %v1481 = vpop.f32.mrf.mxu0
        %v1482 = vadd.f32 %v1337, %v1481
        %v1483 = vpop.f32.mrf.mxu0
        %v1484 = vpop.f32.mrf.mxu0
        %v1485 = vadd.f32 %v1340, %v1484
        %v1486 = vpop.f32.mrf.mxu0
        %1487 = vmatprep.mubr.bf16.mxu0 0
        %1488 = vmatmul.mubr.bf16.gmra.mxu0 %v1417
        %v1489 = vpop.f32.mrf.mxu0
        %v1490 = vadd.f32 %v1345, %v1489
        %v1491 = vpop.f32.mrf.mxu0
        %v1492 = vpop.f32.mrf.mxu0
        %v1493 = vadd.f32 %v1348, %v1492
        %v1494 = vpop.f32.mrf.mxu0
        %1495 = vmatprep.mubr.bf16.mxu0 0
        %1496 = vmatmul.mubr.bf16.gmra.mxu0 %v1420
        %v1497 = vpop.f32.mrf.mxu0
        %v1498 = vadd.f32 %v1353, %v1497
        %v1499 = vpop.f32.mrf.mxu0
        %v1500 = vpop.f32.mrf.mxu0
        %v1501 = vadd.f32 %v1356, %v1500
        %v1502 = vpop.f32.mrf.mxu0
        %1503 = vmatprep.mubr.bf16.mxu0 0
        %1504 = vmatmul.mubr.bf16.gmra.mxu0 %v1423
        %v1505 = vpop.f32.mrf.mxu0
        %v1506 = vadd.f32 %v1361, %v1505
        %v1507 = vpop.f32.mrf.mxu0
        %v1508 = vpop.f32.mrf.mxu0
        %v1509 = vadd.f32 %v1364, %v1508
        %v1510 = vpop.f32.mrf.mxu0
        %1511 = vmatprep.mubr.bf16.mxu0 0
        %1512 = vmatmul.mubr.bf16.gmra.mxu0 %v1426
        %v1513 = vpop.f32.mrf.mxu0
        %v1514 = vadd.f32 %v1369, %v1513
        %v1515 = vpop.f32.mrf.mxu0
        %v1516 = vpop.f32.mrf.mxu0
        %v1517 = vadd.f32 %v1372, %v1516
        %v1518 = vpop.f32.mrf.mxu0
        %1519 = vmatprep.mubr.bf16.mxu0 0
        %1520 = vmatmul.mubr.bf16.gmra.mxu0 %v1429
        %v1521 = vpop.f32.mrf.mxu0
        %v1522 = vadd.f32 %v1377, %v1521
        %v1523 = vpop.f32.mrf.mxu0
        %v1524 = vpop.f32.mrf.mxu0
        %v1525 = vadd.f32 %v1380, %v1524
        %v1526 = vpop.f32.mrf.mxu0
        %1527 = vdwg.mxu0
        %v1528 = vlaneseq
        %v1529 = vshrl.u32 %v1528, 7
        %v1530 = vsub.s32 1, %v1529
        %v1531 = vrot.slane %v355, %v1530
        %v1532 = vadd.f32 %v1466, %v1531
        %v1533 = vadd.f32 %v1469, %v1531
        %v1534 = vadd.f32 %v1474, %v1531
        %v1535 = vadd.f32 %v1477, %v1531
        %v1536 = vadd.f32 %v1482, %v1531
        %v1537 = vadd.f32 %v1485, %v1531
        %v1538 = vadd.f32 %v1490, %v1531
        %v1539 = vadd.f32 %v1493, %v1531
        %v1540 = vadd.f32 %v1498, %v1531
        %v1541 = vadd.f32 %v1501, %v1531
        %v1542 = vadd.f32 %v1506, %v1531
        %v1543 = vadd.f32 %v1509, %v1531
        %v1544 = vadd.f32 %v1514, %v1531
        %v1545 = vadd.f32 %v1517, %v1531
        %v1546 = vadd.f32 %v1522, %v1531
        %v1547 = vadd.f32 %v1525, %v1531
        %v1548 = vxor.u32 %v1532, 2147483648
        %v1549 = vxor.u32 %v1533, 2147483648
        %v1550 = vxor.u32 %v1534, 2147483648
        %v1551 = vxor.u32 %v1535, 2147483648
        %v1552 = vxor.u32 %v1536, 2147483648
        %v1553 = vxor.u32 %v1537, 2147483648
        %v1554 = vxor.u32 %v1538, 2147483648
        %v1555 = vxor.u32 %v1539, 2147483648
        %v1556 = vxor.u32 %v1540, 2147483648
        %v1557 = vxor.u32 %v1541, 2147483648
        %v1558 = vxor.u32 %v1542, 2147483648
        %v1559 = vxor.u32 %v1543, 2147483648
        %v1560 = vxor.u32 %v1544, 2147483648
        %v1561 = vxor.u32 %v1545, 2147483648
        %v1562 = vxor.u32 %v1546, 2147483648
        %v1563 = vxor.u32 %v1547, 2147483648
        %v1564 = vmul.f32 %v1548, 1.442695
        %v1565 = vpow.pop %v1564
        %v1566 = vmul.f32 %v1549, 1.442695
        %v1567 = vpow.pop %v1566
        %v1568 = vmul.f32 %v1550, 1.442695
        %v1569 = vpow.pop %v1568
        %v1570 = vmul.f32 %v1551, 1.442695
        %v1571 = vpow.pop %v1570
        %v1572 = vmul.f32 %v1552, 1.442695
        %v1573 = vpow.pop %v1572
        %v1574 = vmul.f32 %v1553, 1.442695
        %v1575 = vpow.pop %v1574
        %v1576 = vmul.f32 %v1554, 1.442695
        %v1577 = vpow.pop %v1576
        %v1578 = vmul.f32 %v1555, 1.442695
        %v1579 = vpow.pop %v1578
        %v1580 = vmul.f32 %v1556, 1.442695
        %v1581 = vpow.pop %v1580
        %v1582 = vmul.f32 %v1557, 1.442695
        %v1583 = vpow.pop %v1582
        %v1584 = vmul.f32 %v1558, 1.442695
        %v1585 = vpow.pop %v1584
        %v1586 = vmul.f32 %v1559, 1.442695
        %v1587 = vpow.pop %v1586
        %v1588 = vmul.f32 %v1560, 1.442695
        %v1589 = vpow.pop %v1588
        %v1590 = vmul.f32 %v1561, 1.442695
        %v1591 = vpow.pop %v1590
        %v1592 = vmul.f32 %v1562, 1.442695
        %v1593 = vpow.pop %v1592
        %v1594 = vmul.f32 %v1563, 1.442695
        %v1595 = vpow.pop %v1594
        %v1596 = vadd.f32 %v1565, 1.0
        %v1597 = vadd.f32 %v1567, 1.0
        %v1598 = vadd.f32 %v1569, 1.0
        %v1599 = vadd.f32 %v1571, 1.0
        %v1600 = vadd.f32 %v1573, 1.0
        %v1601 = vadd.f32 %v1575, 1.0
        %v1602 = vadd.f32 %v1577, 1.0
        %v1603 = vadd.f32 %v1579, 1.0
        %v1604 = vadd.f32 %v1581, 1.0
        %v1605 = vadd.f32 %v1583, 1.0
        %v1606 = vadd.f32 %v1585, 1.0
        %v1607 = vadd.f32 %v1587, 1.0
        %v1608 = vadd.f32 %v1589, 1.0
        %v1609 = vadd.f32 %v1591, 1.0
        %v1610 = vadd.f32 %v1593, 1.0
        %v1611 = vadd.f32 %v1595, 1.0
        %v1612 = vrcp.pop %v1596
        %v1613 = vmul.f32 1.0, %v1612
        %v1614 = vrcp.pop %v1597
        %v1615 = vmul.f32 1.0, %v1614
        %v1616 = vrcp.pop %v1598
        %v1617 = vmul.f32 1.0, %v1616
        %v1618 = vrcp.pop %v1599
        %v1619 = vmul.f32 1.0, %v1618
        %v1620 = vrcp.pop %v1600
        %v1621 = vmul.f32 1.0, %v1620
        %v1622 = vrcp.pop %v1601
        %v1623 = vmul.f32 1.0, %v1622
        %v1624 = vrcp.pop %v1602
        %v1625 = vmul.f32 1.0, %v1624
        %v1626 = vrcp.pop %v1603
        %v1627 = vmul.f32 1.0, %v1626
        %v1628 = vrcp.pop %v1604
        %v1629 = vmul.f32 1.0, %v1628
        %v1630 = vrcp.pop %v1605
        %v1631 = vmul.f32 1.0, %v1630
        %v1632 = vrcp.pop %v1606
        %v1633 = vmul.f32 1.0, %v1632
        %v1634 = vrcp.pop %v1607
        %v1635 = vmul.f32 1.0, %v1634
        %v1636 = vrcp.pop %v1608
        %v1637 = vmul.f32 1.0, %v1636
        %v1638 = vrcp.pop %v1609
        %v1639 = vmul.f32 1.0, %v1638
        %v1640 = vrcp.pop %v1610
        %v1641 = vmul.f32 1.0, %v1640
        %v1642 = vrcp.pop %v1611
        %v1643 = vmul.f32 1.0, %v1642
        %v1644 = vmul.f32 %v1532, %v1613
        %v1645 = vmul.f32 %v1533, %v1615
        %v1646 = vmul.f32 %v1534, %v1617
        %v1647 = vmul.f32 %v1535, %v1619
        %v1648 = vmul.f32 %v1536, %v1621
        %v1649 = vmul.f32 %v1537, %v1623
        %v1650 = vmul.f32 %v1538, %v1625
        %v1651 = vmul.f32 %v1539, %v1627
        %v1652 = vmul.f32 %v1540, %v1629
        %v1653 = vmul.f32 %v1541, %v1631
        %v1654 = vmul.f32 %v1542, %v1633
        %v1655 = vmul.f32 %v1543, %v1635
        %v1656 = vmul.f32 %v1544, %v1637
        %v1657 = vmul.f32 %v1545, %v1639
        %v1658 = vmul.f32 %v1546, %v1641
        %v1659 = vmul.f32 %v1547, %v1643
        %v1660 = vpack.c.bf16 %v1645, %v1644
        %v1661 = vpack.c.bf16 %v1647, %v1646
        %v1662 = vpack.c.bf16 %v1649, %v1648
        %v1663 = vpack.c.bf16 %v1651, %v1650
        %v1664 = vpack.c.bf16 %v1653, %v1652
        %v1665 = vpack.c.bf16 %v1655, %v1654
        %v1666 = vpack.c.bf16 %v1657, %v1656
        %v1667 = vpack.c.bf16 %v1659, %v1658
        %v1668 = vld [vmem:[%s5] sm:$0xf]
        %v1669 = vld [vmem:[%s5 + $0x4] sm:$0xf]
        %v1670 = vld [vmem:[%s5 + $0x8] sm:$0xf]
        %v1671 = vld [vmem:[%s5 + $0xc] sm:$0xf]
        %v1672 = vld [vmem:[%s5 + $0x10] sm:$0xf]
        %v1673 = vld [vmem:[%s5 + $0x14] sm:$0xf]
        %v1674 = vld [vmem:[%s5 + $0x18] sm:$0xf]
        %v1675 = vld [vmem:[%s5 + $0x1c] sm:$0xf]
        %v1676 = vld [vmem:[%s5 + $0x20] sm:$0xf]
        %v1677 = vld [vmem:[%s5 + $0x24] sm:$0xf]
        %v1678 = vld [vmem:[%s5 + $0x28] sm:$0xf]
        %v1679 = vld [vmem:[%s5 + $0x2c] sm:$0xf]
        %v1680 = vld [vmem:[%s5 + $0x30] sm:$0xf]
        %v1681 = vld [vmem:[%s5 + $0x34] sm:$0xf]
        %v1682 = vld [vmem:[%s5 + $0x38] sm:$0xf]
        %v1683 = vld [vmem:[%s5 + $0x3c] sm:$0xf]
        %v1684 = vlaneseq
        %v1685 = vshrl.u32 %v1684, 7
        %v1686 = vsub.s32 2, %v1685
        %v1687 = vrot.slane %v355, %v1686
        %v1704 = vunpack.c.l.b16 %v1668
        %v1705 = vunpack.c.l.b16 %v1669
        %v1706 = vunpack.c.l.b16 %v1670
        %v1707 = vunpack.c.l.b16 %v1671
        %v1708 = vunpack.c.l.b16 %v1672
        %v1709 = vunpack.c.l.b16 %v1673
        %v1710 = vunpack.c.l.b16 %v1674
        %v1711 = vunpack.c.l.b16 %v1675
        %v1712 = vunpack.c.l.b16 %v1676
        %v1713 = vunpack.c.l.b16 %v1677
        %v1714 = vunpack.c.l.b16 %v1678
        %v1715 = vunpack.c.l.b16 %v1679
        %v1716 = vunpack.c.l.b16 %v1680
        %v1717 = vunpack.c.l.b16 %v1681
        %v1718 = vunpack.c.l.b16 %v1682
        %v1719 = vunpack.c.l.b16 %v1683
        %v1720 = vpack.c.b16 %v1705, %v1704
        %v1721 = vpack.c.b16 %v1707, %v1706
        %v1722 = vpack.c.b16 %v1709, %v1708
        %v1723 = vpack.c.b16 %v1711, %v1710
        %v1724 = vpack.c.b16 %v1713, %v1712
        %v1725 = vpack.c.b16 %v1715, %v1714
        %v1726 = vpack.c.b16 %v1717, %v1716
        %v1727 = vpack.c.b16 %v1719, %v1718
        %1736 = vmatprep.subr.bf16.mxu0 0
        %1737 = vmatpush1.bf16.msra.mxu0 %v1727
        %1738 = vmatprep.subr.bf16.mxu0 0
        %1739 = vmatpush1.bf16.msra.mxu0 %v1726
        %1740 = vmatprep.subr.bf16.mxu0 0
        %1741 = vmatpush1.bf16.msra.mxu0 %v1725
        %1742 = vmatprep.subr.bf16.mxu0 0
        %1743 = vmatpush1.bf16.msra.mxu0 %v1724
        %1744 = vmatprep.subr.bf16.mxu0 0
        %1745 = vmatpush1.bf16.msra.mxu0 %v1723
        %1746 = vmatprep.subr.bf16.mxu0 0
        %1747 = vmatpush1.bf16.msra.mxu0 %v1722
        %1748 = vmatprep.subr.bf16.mxu0 0
        %1749 = vmatpush1.bf16.msra.mxu0 %v1721
        %1750 = vmatprep.subr.bf16.mxu0 0
        %1751 = vmatpush1.bf16.msra.mxu0 %v1720
        %1752 = vmatprep.subr.bf16.mxu0 0
        %1753 = vmatpush2.bf16.msra.mxu0 0
        %1754 = vmatprep.subr.bf16.mxu0 0
        %1755 = vmatpush2.bf16.msra.mxu0 0
        %1756 = vmatprep.subr.bf16.mxu0 0
        %1757 = vmatpush2.bf16.msra.mxu0 0
        %1758 = vmatprep.subr.bf16.mxu0 0
        %1759 = vmatpush2.bf16.msra.mxu0 0
        %1760 = vmatprep.subr.bf16.mxu0 0
        %1761 = vmatpush2.bf16.msra.mxu0 0
        %1762 = vmatprep.subr.bf16.mxu0 0
        %1763 = vmatpush2.bf16.msra.mxu0 0
        %1764 = vmatprep.subr.bf16.mxu0 0
        %1765 = vmatpush2.bf16.msra.mxu0 0
        %1766 = vmatprep.subr.bf16.mxu0 0
        %1767 = vmatpush2.bf16.msra.mxu0 0
        %1768 = vmatprep.mubr.bf16.mxu0 0
        %1769 = vmatmul.mubr.bf16.gmra.mxu0 %v1660
        %v1770 = vpop.f32.mrf.mxu0
        %v1771 = vadd.f32 %v1687, %v1770
        %v1772 = vpop.f32.mrf.mxu0
        %v1773 = vpop.f32.mrf.mxu0
        %v1774 = vadd.f32 %v1687, %v1773
        %v1775 = vpop.f32.mrf.mxu0
        %1776 = vmatprep.mubr.bf16.mxu0 0
        %1777 = vmatmul.mubr.bf16.gmra.mxu0 %v1661
        %v1778 = vpop.f32.mrf.mxu0
        %v1779 = vadd.f32 %v1687, %v1778
        %v1780 = vpop.f32.mrf.mxu0
        %v1781 = vpop.f32.mrf.mxu0
        %v1782 = vadd.f32 %v1687, %v1781
        %v1783 = vpop.f32.mrf.mxu0
        %1784 = vmatprep.mubr.bf16.mxu0 0
        %1785 = vmatmul.mubr.bf16.gmra.mxu0 %v1662
        %v1786 = vpop.f32.mrf.mxu0
        %v1787 = vadd.f32 %v1687, %v1786
        %v1788 = vpop.f32.mrf.mxu0
        %v1789 = vpop.f32.mrf.mxu0
        %v1790 = vadd.f32 %v1687, %v1789
        %v1791 = vpop.f32.mrf.mxu0
        %1792 = vmatprep.mubr.bf16.mxu0 0
        %1793 = vmatmul.mubr.bf16.gmra.mxu0 %v1663
        %v1794 = vpop.f32.mrf.mxu0
        %v1795 = vadd.f32 %v1687, %v1794
        %v1796 = vpop.f32.mrf.mxu0
        %v1797 = vpop.f32.mrf.mxu0
        %v1798 = vadd.f32 %v1687, %v1797
        %v1799 = vpop.f32.mrf.mxu0
        %1800 = vmatprep.mubr.bf16.mxu0 0
        %1801 = vmatmul.mubr.bf16.gmra.mxu0 %v1664
        %v1802 = vpop.f32.mrf.mxu0
        %v1803 = vadd.f32 %v1687, %v1802
        %v1804 = vpop.f32.mrf.mxu0
        %v1805 = vpop.f32.mrf.mxu0
        %v1806 = vadd.f32 %v1687, %v1805
        %v1807 = vpop.f32.mrf.mxu0
        %1808 = vmatprep.mubr.bf16.mxu0 0
        %1809 = vmatmul.mubr.bf16.gmra.mxu0 %v1665
        %v1810 = vpop.f32.mrf.mxu0
        %v1811 = vadd.f32 %v1687, %v1810
        %v1812 = vpop.f32.mrf.mxu0
        %v1813 = vpop.f32.mrf.mxu0
        %v1814 = vadd.f32 %v1687, %v1813
        %v1815 = vpop.f32.mrf.mxu0
        %1816 = vmatprep.mubr.bf16.mxu0 0
        %1817 = vmatmul.mubr.bf16.gmra.mxu0 %v1666
        %v1818 = vpop.f32.mrf.mxu0
        %v1819 = vadd.f32 %v1687, %v1818
        %v1820 = vpop.f32.mrf.mxu0
        %v1821 = vpop.f32.mrf.mxu0
        %v1822 = vadd.f32 %v1687, %v1821
        %v1823 = vpop.f32.mrf.mxu0
        %1824 = vmatprep.mubr.bf16.mxu0 0
        %1825 = vmatmul.mubr.bf16.gmra.mxu0 %v1667
        %v1826 = vpop.f32.mrf.mxu0
        %v1827 = vadd.f32 %v1687, %v1826
        %v1828 = vpop.f32.mrf.mxu0
        %v1829 = vpop.f32.mrf.mxu0
        %v1830 = vadd.f32 %v1687, %v1829
        %v1831 = vpop.f32.mrf.mxu0
        %1832 = vdwg.mxu0
        %v1833 = vxor.u32 %v1771, 2147483648
        %v1834 = vxor.u32 %v1774, 2147483648
        %v1835 = vxor.u32 %v1779, 2147483648
        %v1836 = vxor.u32 %v1782, 2147483648
        %v1837 = vxor.u32 %v1787, 2147483648
        %v1838 = vxor.u32 %v1790, 2147483648
        %v1839 = vxor.u32 %v1795, 2147483648
        %v1840 = vxor.u32 %v1798, 2147483648
        %v1841 = vxor.u32 %v1803, 2147483648
        %v1842 = vxor.u32 %v1806, 2147483648
        %v1843 = vxor.u32 %v1811, 2147483648
        %v1844 = vxor.u32 %v1814, 2147483648
        %v1845 = vxor.u32 %v1819, 2147483648
        %v1846 = vxor.u32 %v1822, 2147483648
        %v1847 = vxor.u32 %v1827, 2147483648
        %v1848 = vxor.u32 %v1830, 2147483648
        %v1849 = vmul.f32 %v1833, 1.442695
        %v1850 = vpow.pop %v1849
        %v1851 = vmul.f32 %v1834, 1.442695
        %v1852 = vpow.pop %v1851
        %v1853 = vmul.f32 %v1835, 1.442695
        %v1854 = vpow.pop %v1853
        %v1855 = vmul.f32 %v1836, 1.442695
        %v1856 = vpow.pop %v1855
        %v1857 = vmul.f32 %v1837, 1.442695
        %v1858 = vpow.pop %v1857
        %v1859 = vmul.f32 %v1838, 1.442695
        %v1860 = vpow.pop %v1859
        %v1861 = vmul.f32 %v1839, 1.442695
        %v1862 = vpow.pop %v1861
        %v1863 = vmul.f32 %v1840, 1.442695
        %v1864 = vpow.pop %v1863
        %v1865 = vmul.f32 %v1841, 1.442695
        %v1866 = vpow.pop %v1865
        %v1867 = vmul.f32 %v1842, 1.442695
        %v1868 = vpow.pop %v1867
        %v1869 = vmul.f32 %v1843, 1.442695
        %v1870 = vpow.pop %v1869
        %v1871 = vmul.f32 %v1844, 1.442695
        %v1872 = vpow.pop %v1871
        %v1873 = vmul.f32 %v1845, 1.442695
        %v1874 = vpow.pop %v1873
        %v1875 = vmul.f32 %v1846, 1.442695
        %v1876 = vpow.pop %v1875
        %v1877 = vmul.f32 %v1847, 1.442695
        %v1878 = vpow.pop %v1877
        %v1879 = vmul.f32 %v1848, 1.442695
        %v1880 = vpow.pop %v1879
        %v1881 = vadd.f32 %v1850, 1.0
        %v1882 = vadd.f32 %v1852, 1.0
        %v1883 = vadd.f32 %v1854, 1.0
        %v1884 = vadd.f32 %v1856, 1.0
        %v1885 = vadd.f32 %v1858, 1.0
        %v1886 = vadd.f32 %v1860, 1.0
        %v1887 = vadd.f32 %v1862, 1.0
        %v1888 = vadd.f32 %v1864, 1.0
        %v1889 = vadd.f32 %v1866, 1.0
        %v1890 = vadd.f32 %v1868, 1.0
        %v1891 = vadd.f32 %v1870, 1.0
        %v1892 = vadd.f32 %v1872, 1.0
        %v1893 = vadd.f32 %v1874, 1.0
        %v1894 = vadd.f32 %v1876, 1.0
        %v1895 = vadd.f32 %v1878, 1.0
        %v1896 = vadd.f32 %v1880, 1.0
        %v1897 = vrcp.pop %v1881
        %v1898 = vmul.f32 1.0, %v1897
        %v1899 = vrcp.pop %v1882
        %v1900 = vmul.f32 1.0, %v1899
        %v1901 = vrcp.pop %v1883
        %v1902 = vmul.f32 1.0, %v1901
        %v1903 = vrcp.pop %v1884
        %v1904 = vmul.f32 1.0, %v1903
        %v1905 = vrcp.pop %v1885
        %v1906 = vmul.f32 1.0, %v1905
        %v1907 = vrcp.pop %v1886
        %v1908 = vmul.f32 1.0, %v1907
        %v1909 = vrcp.pop %v1887
        %v1910 = vmul.f32 1.0, %v1909
        %v1911 = vrcp.pop %v1888
        %v1912 = vmul.f32 1.0, %v1911
        %v1913 = vrcp.pop %v1889
        %v1914 = vmul.f32 1.0, %v1913
        %v1915 = vrcp.pop %v1890
        %v1916 = vmul.f32 1.0, %v1915
        %v1917 = vrcp.pop %v1891
        %v1918 = vmul.f32 1.0, %v1917
        %v1919 = vrcp.pop %v1892
        %v1920 = vmul.f32 1.0, %v1919
        %v1921 = vrcp.pop %v1893
        %v1922 = vmul.f32 1.0, %v1921
        %v1923 = vrcp.pop %v1894
        %v1924 = vmul.f32 1.0, %v1923
        %v1925 = vrcp.pop %v1895
        %v1926 = vmul.f32 1.0, %v1925
        %v1927 = vrcp.pop %v1896
        %v1928 = vmul.f32 1.0, %v1927
        %v1929 = vmul.f32 %v1771, %v1898
        %v1930 = vmul.f32 %v1774, %v1900
        %v1931 = vmul.f32 %v1779, %v1902
        %v1932 = vmul.f32 %v1782, %v1904
        %v1933 = vmul.f32 %v1787, %v1906
        %v1934 = vmul.f32 %v1790, %v1908
        %v1935 = vmul.f32 %v1795, %v1910
        %v1936 = vmul.f32 %v1798, %v1912
        %v1937 = vmul.f32 %v1803, %v1914
        %v1938 = vmul.f32 %v1806, %v1916
        %v1939 = vmul.f32 %v1811, %v1918
        %v1940 = vmul.f32 %v1814, %v1920
        %v1941 = vmul.f32 %v1819, %v1922
        %v1942 = vmul.f32 %v1822, %v1924
        %v1943 = vmul.f32 %v1827, %v1926
        %v1944 = vmul.f32 %v1830, %v1928
        %v1945 = vpack.c.bf16 %v1930, %v1929
        %v1946 = vpack.c.bf16 %v1932, %v1931
        %v1947 = vpack.c.bf16 %v1934, %v1933
        %v1948 = vpack.c.bf16 %v1936, %v1935
        %v1949 = vpack.c.bf16 %v1938, %v1937
        %v1950 = vpack.c.bf16 %v1940, %v1939
        %v1951 = vpack.c.bf16 %v1942, %v1941
        %v1952 = vpack.c.bf16 %v1944, %v1943
        %v1953 = vld [vmem:[%s6] sm:$0xf]
        %v1954 = vld [vmem:[%s6 + $0x4] sm:$0xf]
        %v1955 = vld [vmem:[%s6 + $0x8] sm:$0xf]
        %v1956 = vld [vmem:[%s6 + $0xc] sm:$0xf]
        %v1957 = vld [vmem:[%s6 + $0x10] sm:$0xf]
        %v1958 = vld [vmem:[%s6 + $0x14] sm:$0xf]
        %v1959 = vld [vmem:[%s6 + $0x18] sm:$0xf]
        %v1960 = vld [vmem:[%s6 + $0x1c] sm:$0xf]
        %v1961 = vlaneseq
        %v1962 = vshrl.u32 %v1961, 7
        %v1963 = vsub.s32 3, %v1962
        %v1964 = vrot.slane %v355, %v1963
        %v1973 = vunpack.c.l.b16 %v1953
        %v1974 = vunpack.c.l.b16 %v1954
        %v1975 = vunpack.c.l.b16 %v1955
        %v1976 = vunpack.c.l.b16 %v1956
        %v1977 = vunpack.c.l.b16 %v1957
        %v1978 = vunpack.c.l.b16 %v1958
        %v1979 = vunpack.c.l.b16 %v1959
        %v1980 = vunpack.c.l.b16 %v1960
        %v1981 = vpack.c.b16 %v1974, %v1973
        %v1982 = vpack.c.b16 %v1976, %v1975
        %v1983 = vpack.c.b16 %v1978, %v1977
        %v1984 = vpack.c.b16 %v1980, %v1979
        %v1990 = vsel %vm850, %v1945, 0
        %v1993 = vsel %vm850, %v1946, 0
        %v1996 = vsel %vm850, %v1947, 0
        %v1999 = vsel %vm850, %v1948, 0
        %v2002 = vsel %vm850, %v1949, 0
        %v2005 = vsel %vm850, %v1950, 0
        %v2008 = vsel %vm850, %v1951, 0
        %v2011 = vsel %vm850, %v1952, 0
        %2013 = vmatprep.subr.bf16.mxu0 0
        %2014 = vmatpush1.bf16.msra.mxu0 0
        %2015 = vmatprep.subr.bf16.mxu0 0
        %2016 = vmatpush1.bf16.msra.mxu0 0
        %2017 = vmatprep.subr.bf16.mxu0 0
        %2018 = vmatpush1.bf16.msra.mxu0 0
        %2019 = vmatprep.subr.bf16.mxu0 0
        %2020 = vmatpush1.bf16.msra.mxu0 0
        %2021 = vmatprep.subr.bf16.mxu0 0
        %2022 = vmatpush1.bf16.msra.mxu0 %v1984
        %2023 = vmatprep.subr.bf16.mxu0 0
        %2024 = vmatpush1.bf16.msra.mxu0 %v1983
        %2025 = vmatprep.subr.bf16.mxu0 0
        %2026 = vmatpush1.bf16.msra.mxu0 %v1982
        %2027 = vmatprep.subr.bf16.mxu0 0
        %2028 = vmatpush1.bf16.msra.mxu0 %v1981
        %2029 = vmatprep.subr.bf16.mxu0 0
        %2030 = vmatpush2.bf16.msra.mxu0 0
        %2031 = vmatprep.subr.bf16.mxu0 0
        %2032 = vmatpush2.bf16.msra.mxu0 0
        %2033 = vmatprep.subr.bf16.mxu0 0
        %2034 = vmatpush2.bf16.msra.mxu0 0
        %2035 = vmatprep.subr.bf16.mxu0 0
        %2036 = vmatpush2.bf16.msra.mxu0 0
        %2037 = vmatprep.subr.bf16.mxu0 0
        %2038 = vmatpush2.bf16.msra.mxu0 0
        %2039 = vmatprep.subr.bf16.mxu0 0
        %2040 = vmatpush2.bf16.msra.mxu0 0
        %2041 = vmatprep.subr.bf16.mxu0 0
        %2042 = vmatpush2.bf16.msra.mxu0 0
        %2043 = vmatprep.subr.bf16.mxu0 0
        %2044 = vmatpush2.bf16.msra.mxu0 0
        %2045 = vmatprep.mubr.bf16.mxu0 0
        %2046 = vmatmul.mubr.bf16.gmra.mxu0 %v1990
        %v2047 = vpop.f32.mrf.mxu0
        %v2048 = vadd.f32 %v1964, %v2047
        %v2049 = vpop.f32.mrf.mxu0
        %v2050 = vpop.f32.mrf.mxu0
        %v2051 = vadd.f32 %v1964, %v2050
        %v2052 = vpop.f32.mrf.mxu0
        %2053 = vmatprep.mubr.bf16.mxu0 0
        %2054 = vmatmul.mubr.bf16.gmra.mxu0 %v1993
        %v2055 = vpop.f32.mrf.mxu0
        %v2056 = vadd.f32 %v1964, %v2055
        %v2057 = vpop.f32.mrf.mxu0
        %v2058 = vpop.f32.mrf.mxu0
        %v2059 = vadd.f32 %v1964, %v2058
        %v2060 = vpop.f32.mrf.mxu0
        %2061 = vmatprep.mubr.bf16.mxu0 0
        %2062 = vmatmul.mubr.bf16.gmra.mxu0 %v1996
        %v2063 = vpop.f32.mrf.mxu0
        %v2064 = vadd.f32 %v1964, %v2063
        %v2065 = vpop.f32.mrf.mxu0
        %v2066 = vpop.f32.mrf.mxu0
        %v2067 = vadd.f32 %v1964, %v2066
        %v2068 = vpop.f32.mrf.mxu0
        %2069 = vmatprep.mubr.bf16.mxu0 0
        %2070 = vmatmul.mubr.bf16.gmra.mxu0 %v1999
        %v2071 = vpop.f32.mrf.mxu0
        %v2072 = vadd.f32 %v1964, %v2071
        %v2073 = vpop.f32.mrf.mxu0
        %v2074 = vpop.f32.mrf.mxu0
        %v2075 = vadd.f32 %v1964, %v2074
        %v2076 = vpop.f32.mrf.mxu0
        %2077 = vmatprep.mubr.bf16.mxu0 0
        %2078 = vmatmul.mubr.bf16.gmra.mxu0 %v2002
        %v2079 = vpop.f32.mrf.mxu0
        %v2080 = vadd.f32 %v1964, %v2079
        %v2081 = vpop.f32.mrf.mxu0
        %v2082 = vpop.f32.mrf.mxu0
        %v2083 = vadd.f32 %v1964, %v2082
        %v2084 = vpop.f32.mrf.mxu0
        %2085 = vmatprep.mubr.bf16.mxu0 0
        %2086 = vmatmul.mubr.bf16.gmra.mxu0 %v2005
        %v2087 = vpop.f32.mrf.mxu0
        %v2088 = vadd.f32 %v1964, %v2087
        %v2089 = vpop.f32.mrf.mxu0
        %v2090 = vpop.f32.mrf.mxu0
        %v2091 = vadd.f32 %v1964, %v2090
        %v2092 = vpop.f32.mrf.mxu0
        %2093 = vmatprep.mubr.bf16.mxu0 0
        %2094 = vmatmul.mubr.bf16.gmra.mxu0 %v2008
        %v2095 = vpop.f32.mrf.mxu0
        %v2096 = vadd.f32 %v1964, %v2095
        %v2097 = vpop.f32.mrf.mxu0
        %v2098 = vpop.f32.mrf.mxu0
        %v2099 = vadd.f32 %v1964, %v2098
        %v2100 = vpop.f32.mrf.mxu0
        %2101 = vmatprep.mubr.bf16.mxu0 0
        %2102 = vmatmul.mubr.bf16.gmra.mxu0 %v2011
        %v2103 = vpop.f32.mrf.mxu0
        %v2104 = vadd.f32 %v1964, %v2103
        %v2105 = vpop.f32.mrf.mxu0
        %v2106 = vpop.f32.mrf.mxu0
        %v2107 = vadd.f32 %v1964, %v2106
        %v2108 = vpop.f32.mrf.mxu0
        %2109 = vdwg.mxu0
        %v2110 = vxor.u32 %v2048, 2147483648
        %v2111 = vxor.u32 %v2051, 2147483648
        %v2112 = vxor.u32 %v2056, 2147483648
        %v2113 = vxor.u32 %v2059, 2147483648
        %v2114 = vxor.u32 %v2064, 2147483648
        %v2115 = vxor.u32 %v2067, 2147483648
        %v2116 = vxor.u32 %v2072, 2147483648
        %v2117 = vxor.u32 %v2075, 2147483648
        %v2118 = vxor.u32 %v2080, 2147483648
        %v2119 = vxor.u32 %v2083, 2147483648
        %v2120 = vxor.u32 %v2088, 2147483648
        %v2121 = vxor.u32 %v2091, 2147483648
        %v2122 = vxor.u32 %v2096, 2147483648
        %v2123 = vxor.u32 %v2099, 2147483648
        %v2124 = vxor.u32 %v2104, 2147483648
        %v2125 = vxor.u32 %v2107, 2147483648
        %v2126 = vmul.f32 %v2110, 1.442695
        %v2127 = vpow.pop %v2126
        %v2128 = vmul.f32 %v2111, 1.442695
        %v2129 = vpow.pop %v2128
        %v2130 = vmul.f32 %v2112, 1.442695
        %v2131 = vpow.pop %v2130
        %v2132 = vmul.f32 %v2113, 1.442695
        %v2133 = vpow.pop %v2132
        %v2134 = vmul.f32 %v2114, 1.442695
        %v2135 = vpow.pop %v2134
        %v2136 = vmul.f32 %v2115, 1.442695
        %v2137 = vpow.pop %v2136
        %v2138 = vmul.f32 %v2116, 1.442695
        %v2139 = vpow.pop %v2138
        %v2140 = vmul.f32 %v2117, 1.442695
        %v2141 = vpow.pop %v2140
        %v2142 = vmul.f32 %v2118, 1.442695
        %v2143 = vpow.pop %v2142
        %v2144 = vmul.f32 %v2119, 1.442695
        %v2145 = vpow.pop %v2144
        %v2146 = vmul.f32 %v2120, 1.442695
        %v2147 = vpow.pop %v2146
        %v2148 = vmul.f32 %v2121, 1.442695
        %v2149 = vpow.pop %v2148
        %v2150 = vmul.f32 %v2122, 1.442695
        %v2151 = vpow.pop %v2150
        %v2152 = vmul.f32 %v2123, 1.442695
        %v2153 = vpow.pop %v2152
        %v2154 = vmul.f32 %v2124, 1.442695
        %v2155 = vpow.pop %v2154
        %v2156 = vmul.f32 %v2125, 1.442695
        %v2157 = vpow.pop %v2156
        %v2158 = vadd.f32 %v2127, 1.0
        %v2159 = vadd.f32 %v2129, 1.0
        %v2160 = vadd.f32 %v2131, 1.0
        %v2161 = vadd.f32 %v2133, 1.0
        %v2162 = vadd.f32 %v2135, 1.0
        %v2163 = vadd.f32 %v2137, 1.0
        %v2164 = vadd.f32 %v2139, 1.0
        %v2165 = vadd.f32 %v2141, 1.0
        %v2166 = vadd.f32 %v2143, 1.0
        %v2167 = vadd.f32 %v2145, 1.0
        %v2168 = vadd.f32 %v2147, 1.0
        %v2169 = vadd.f32 %v2149, 1.0
        %v2170 = vadd.f32 %v2151, 1.0
        %v2171 = vadd.f32 %v2153, 1.0
        %v2172 = vadd.f32 %v2155, 1.0
        %v2173 = vadd.f32 %v2157, 1.0
        %v2174 = vrcp.pop %v2158
        %v2175 = vmul.f32 1.0, %v2174
        %v2176 = vrcp.pop %v2159
        %v2177 = vmul.f32 1.0, %v2176
        %v2178 = vrcp.pop %v2160
        %v2179 = vmul.f32 1.0, %v2178
        %v2180 = vrcp.pop %v2161
        %v2181 = vmul.f32 1.0, %v2180
        %v2182 = vrcp.pop %v2162
        %v2183 = vmul.f32 1.0, %v2182
        %v2184 = vrcp.pop %v2163
        %v2185 = vmul.f32 1.0, %v2184
        %v2186 = vrcp.pop %v2164
        %v2187 = vmul.f32 1.0, %v2186
        %v2188 = vrcp.pop %v2165
        %v2189 = vmul.f32 1.0, %v2188
        %v2190 = vrcp.pop %v2166
        %v2191 = vmul.f32 1.0, %v2190
        %v2192 = vrcp.pop %v2167
        %v2193 = vmul.f32 1.0, %v2192
        %v2194 = vrcp.pop %v2168
        %v2195 = vmul.f32 1.0, %v2194
        %v2196 = vrcp.pop %v2169
        %v2197 = vmul.f32 1.0, %v2196
        %v2198 = vrcp.pop %v2170
        %v2199 = vmul.f32 1.0, %v2198
        %v2200 = vrcp.pop %v2171
        %v2201 = vmul.f32 1.0, %v2200
        %v2202 = vrcp.pop %v2172
        %v2203 = vmul.f32 1.0, %v2202
        %v2204 = vrcp.pop %v2173
        %v2205 = vmul.f32 1.0, %v2204
        %v2206 = vmul.f32 %v2048, %v2175
        %v2207 = vmul.f32 %v2051, %v2177
        %v2208 = vmul.f32 %v2056, %v2179
        %v2209 = vmul.f32 %v2059, %v2181
        %v2210 = vmul.f32 %v2064, %v2183
        %v2211 = vmul.f32 %v2067, %v2185
        %v2212 = vmul.f32 %v2072, %v2187
        %v2213 = vmul.f32 %v2075, %v2189
        %v2214 = vmul.f32 %v2080, %v2191
        %v2215 = vmul.f32 %v2083, %v2193
        %v2216 = vmul.f32 %v2088, %v2195
        %v2217 = vmul.f32 %v2091, %v2197
        %v2218 = vmul.f32 %v2096, %v2199
        %v2219 = vmul.f32 %v2099, %v2201
        %v2220 = vmul.f32 %v2104, %v2203
        %v2221 = vmul.f32 %v2107, %v2205
        %v2222 = vld [vmem:[%s7] sm:$0xf]
        %v2223 = vpack.c.bf16 %v2207, %v2206
        %v2224 = vpack.c.bf16 %v2209, %v2208
        %v2225 = vpack.c.bf16 %v2211, %v2210
        %v2226 = vpack.c.bf16 %v2213, %v2212
        %v2227 = vpack.c.bf16 %v2215, %v2214
        %v2228 = vpack.c.bf16 %v2217, %v2216
        %v2229 = vpack.c.bf16 %v2219, %v2218
        %v2230 = vpack.c.bf16 %v2221, %v2220
        %vm2231 = vcmask 261120
        %v2233 = vsel %vm2231, %v2222, 0
        %v2236 = vsel %vm2231, %v2223, 0
        %v2239 = vsel %vm2231, %v2224, 0
        %v2242 = vsel %vm2231, %v2225, 0
        %v2245 = vsel %vm2231, %v2226, 0
        %v2248 = vsel %vm2231, %v2227, 0
        %v2251 = vsel %vm2231, %v2228, 0
        %v2254 = vsel %vm2231, %v2229, 0
        %v2257 = vsel %vm2231, %v2230, 0
        %2259 = vmatprep.subr.bf16.mxu0 0
        %2260 = vmatpush1.bf16.xpose.msra.mxu0 %v2257
        %2261 = vmatprep.subr.bf16.mxu0 0
        %2262 = vmatpush1.bf16.xpose.msra.mxu0 %v2254
        %2263 = vmatprep.subr.bf16.mxu0 0
        %2264 = vmatpush1.bf16.xpose.msra.mxu0 %v2251
        %2265 = vmatprep.subr.bf16.mxu0 0
        %2266 = vmatpush1.bf16.xpose.msra.mxu0 %v2248
        %2267 = vmatprep.subr.bf16.mxu0 0
        %2268 = vmatpush1.bf16.xpose.msra.mxu0 %v2245
        %2269 = vmatprep.subr.bf16.mxu0 0
        %2270 = vmatpush1.bf16.xpose.msra.mxu0 %v2242
        %2271 = vmatprep.subr.bf16.mxu0 0
        %2272 = vmatpush1.bf16.xpose.msra.mxu0 %v2239
        %2273 = vmatprep.subr.bf16.mxu0 0
        %2274 = vmatpush1.bf16.xpose.msra.mxu0 %v2236
        %2275 = vmatprep.subr.bf16.mxu0 0
        %2276 = vmatpush2.bf16.xpose.msra.mxu0 0
        %2277 = vmatprep.subr.bf16.mxu0 0
        %2278 = vmatpush2.bf16.xpose.msra.mxu0 0
        %2279 = vmatprep.subr.bf16.mxu0 0
        %2280 = vmatpush2.bf16.xpose.msra.mxu0 0
        %2281 = vmatprep.subr.bf16.mxu0 0
        %2282 = vmatpush2.bf16.xpose.msra.mxu0 0
        %2283 = vmatprep.subr.bf16.mxu0 0
        %2284 = vmatpush2.bf16.xpose.msra.mxu0 0
        %2285 = vmatprep.subr.bf16.mxu0 0
        %2286 = vmatpush2.bf16.xpose.msra.mxu0 0
        %2287 = vmatprep.subr.bf16.mxu0 0
        %2288 = vmatpush2.bf16.xpose.msra.mxu0 0
        %2289 = vmatprep.subr.bf16.mxu0 0
        %2290 = vmatpush2.bf16.xpose.msra.mxu0 0
        %2291 = vmatprep.mubr.bf16.mxu0 0
        %2292 = vmatmul.mubr.bf16.gmra.mxu0 %v2233
        %v2293 = vpop.f32.mrf.mxu0
        %v2294 = vadd.f32 0.0, %v2293
        %v2295 = vpop.f32.mrf.mxu0
        %v2296 = vpop.f32.mrf.mxu0
        %v2297 = vpop.f32.mrf.mxu0
        %2298 = vdwg.mxu0
        %2300 = vset.pattern.permute.xlu0 0
        %2301 = vperm.xlu0 %2300, %v355
        %v2302 = vpop.permute.xlu0 %2301
        %v2303 = vrot.slane %v2302, 4
        %v2305 = vadd.f32 %v2294, %v2303
        %2306 = vst [vmem:[%s341] sm:$0x1] %v2305
        %s2307 = sand.u32 %s230, 1
        %s2308 = scalar_lea.sflag [#allocation3], %s2307
        %s2309 = sand.u32 %s230, 1
        %s2310 = scalar_lea.vmem [#allocation2], %s2309
        // Predicated region
        $region57: #{model_forward.1} parent=55 // pred_check
          %p2311 = pneg %p240
        $region58: #{model_forward.1} parent=55 // pred_check_branch
          %2313 = sbr.rel (%p2311) target = $region60
        $region59: #{model_forward.1} parent=55 // pred_region
          %s2315 = ssub.s32 16, 16
          %2316 = vsyncadd %s2308, %s2315
          %s2317 = smul.addr %s23, 16
          %s2318 = scalar_lea.hbm %s9, %s2317
          %s2320 = sshll.u32 %s2310, 4
          %s2321 = int_to_ptr.vmem [resolvable:$true] %s2320
          %2323 = dma.vmem_to_hbm [thread:$0]  %s2321, 16, %s2318, %s2308
        $region60: #{model_forward.1} parent=55 // pred_fallthru
          _
      $region56: #{model_forward.1} parent=5 // pred_fallthru
        _
      %p2324 = scmp.le.s32.totalorder 2, %s18
      // Predicated region
      $region61: #{model_forward.1} parent=5 // pred_check
        %p2325 = pneg %p2324
      $region62: #{model_forward.1} parent=5 // pred_check_branch
        %2327 = sbr.rel (%p2325) target = $region64
      $region63: #{model_forward.1} parent=5 // pred_region
        %s2328 = ssub.s32 %s18, 2
        // Predicated region
        $region65: #{model_forward.1} parent=63 // pred_check
          %p2329 = pneg %p246
        $region66: #{model_forward.1} parent=63 // pred_check_branch
          %2331 = sbr.rel (%p2329) target = $region68
        $region67: #{model_forward.1} parent=63 // pred_region
          %s2332 = sand.u32 %s231, 1
          %s2333 = scalar_lea.sflag [#allocation3], %s2332
          %s2334 = sand.u32 %s231, 1
          %s2335 = scalar_lea.vmem [#allocation2], %s2334
          %2336 = dma.done %s2333, 16
        $region68: #{model_forward.1} parent=63 // pred_fallthru
          _
      $region64: #{model_forward.1} parent=5 // pred_fallthru
        _
    $region6: #{model_forward.1} parent=1 // loop_footer
      %s22 = sadd.s32 1, %s18
    $region7: #{model_forward.1} parent=1 // loop_footer_branch
      %17 = sbr.rel target = $region3
    $region8: #{model_forward.1} parent=1 // loop_exit
      _
    %2337 = vsyncpa [#allocation3], 1
    %s2338 = scalar_lea.sflag [#allocation3], 1
    %2339 = vsyncpa %s2338, 1

</llo_original>
